<compile_context>
chip_gen: v7x
topology: tpu7x:2x2x1
jax: 0.10.0
libtpu: 0.0.40
codegen_flags: <defaults>
</compile_context>

<pallas_src>
import functools

import jax
import jax.numpy as jnp
from jax.experimental import pallas as pl
from jax.experimental.pallas import tpu as pltpu


def _mha_kernel(q_ref, k_ref, v_ref, w_ref, b_ref, *out_refs,
                scaling, inv_heads, need_weights):
    """One grid step = `batch_block` batch elements.

    q_ref: (Bb, H, L, Dh), k_ref/v_ref: (Bb, H, S, Dh)
    w_ref: (H, Dh, E) fused, pre-transposed output-projection weight
    b_ref: (1, E) fused bias
    out_refs[0]: (Bb, L, E); out_refs[1] (optional): (Bb, L, S)
    """
    out_ref = out_refs[0]
    w = w_ref[...]            # loop-invariant fused weight, loaded once
    b = b_ref[...]            # (1, E)

    for i in range(q_ref.shape[0]):          # static batch_block, unrolled
        q = q_ref[i] * scaling                # (H, L, Dh): one full-tile VPU mul
        k = k_ref[i]                          # (H, S, Dh)
        v = v_ref[i]                          # (H, S, Dh)

        # scores, batched over heads (leading batch dim -> single MXU push)
        s = jnp.einsum('hld,hsd->hls', q, k,
                       preferred_element_type=jnp.float32)       # (H, L, S)

        # numerically stable softmax over S (kept in f32)
        m = jnp.max(s, axis=-1, keepdims=True)
        e = jnp.exp(s - m)
        denom = jnp.sum(e, axis=-1, keepdims=True)
        p = e * pl.reciprocal(denom, approx=True)                 # (H, L, S)

        # attention output, batched over heads
        o = jnp.einsum('hls,hsd->hld', p.astype(v.dtype), v,
                       preferred_element_type=jnp.float32)        # (H, L, Dh)

        # fused half-split + out_proj1/out_proj2: per-head (Dh, E) matmul,
        # then a cheap sum over the H leading tiles. No concat, no transpose.
        y = jnp.einsum('hld,hde->hle', o, w,
                       preferred_element_type=jnp.float32)        # (H, L, E)
        out_ref[i] = (jnp.sum(y, axis=0) + b).astype(out_ref.dtype)

        if need_weights:
            out_refs[1][i] = (jnp.sum(p, axis=0) * inv_heads
                              ).astype(out_refs[1].dtype)


def modified_multihead_attention(query, key, value, w1, b1, w2, b2, *,
                                 num_heads, need_weights=True, batch_block=1):
    """query: (N, L, E), key/value: (N, S, E).

    Returns (attn_out (N, L, E), attn_wts (N, L, S) or None).
    """
    bsz, tgt_len, embed_dim = query.shape
    src_len = key.shape[1]
    assert embed_dim % num_heads == 0, "embed_dim must be divisible by num_heads"
    head_dim = embed_dim // num_heads
    assert head_dim % 2 == 0, "head_dim must be divisible by 2"
    half = head_dim // 2
    half_embed = embed_dim // 2
    assert bsz % batch_block == 0, "bsz must be divisible by batch_block"
    scaling = float(head_dim) ** (-0.5)

    # ---- wrapper-side layout plumbing (pure XLA, zero in-kernel transposes) --
    # split heads: (N, T, E) -> (N, H, T, Dh)
    q_h = query.reshape(bsz, tgt_len, num_heads, head_dim).transpose(0, 2, 1, 3)
    k_h = key.reshape(bsz, src_len, num_heads, head_dim).transpose(0, 2, 1, 3)
    v_h = value.reshape(bsz, src_len, num_heads, head_dim).transpose(0, 2, 1, 3)

    # Fuse the head-half split and the two output projections into one
    # pre-transposed per-head weight w_head (H, Dh, E):
    #   out[l, e] = sum_{h,d} o[h, l, d] * w_head[h, d, e] + b_full[e]
    # where for d <  Dh/2:  w_head[h, d, j]          = w1[j, h*half + d]
    #       for d >= Dh/2:  w_head[h, d, E/2 + j]    = w2[j, h*half + (d-half)]
    w1_h = jnp.transpose(w1.reshape(half_embed, num_heads, half), (1, 2, 0))
    w2_h = jnp.transpose(w2.reshape(half_embed, num_heads, half), (1, 2, 0))
    zeros = jnp.zeros((num_heads, half, half_embed), dtype=w1.dtype)
    w_head = jnp.concatenate(
        [jnp.concatenate([w1_h, zeros], axis=-1),     # rows d <  half
         jnp.concatenate([zeros, w2_h], axis=-1)],    # rows d >= half
        axis=1)                                       # (H, Dh, E)
    b_full = jnp.concatenate([b1, b2]).reshape(1, embed_dim)

    kernel = functools.partial(_mha_kernel, scaling=scaling,
                               inv_heads=1.0 / float(num_heads),
                               need_weights=need_weights)

    grid = (bsz // batch_block,)
    in_specs = [
        pl.BlockSpec((batch_block, num_heads, tgt_len, head_dim),
                     lambda b: (b, 0, 0, 0)),                       # q heads
        pl.BlockSpec((batch_block, num_heads, src_len, head_dim),
                     lambda b: (b, 0, 0, 0)),                       # k heads
        pl.BlockSpec((batch_block, num_heads, src_len, head_dim),
                     lambda b: (b, 0, 0, 0)),                       # v heads
        pl.BlockSpec((num_heads, head_dim, embed_dim),
                     lambda b: (0, 0, 0)),                          # fused W
        pl.BlockSpec((1, embed_dim), lambda b: (0, 0)),             # fused bias
    ]
    out_specs = [pl.BlockSpec((batch_block, tgt_len, embed_dim),
                              lambda b: (b, 0, 0))]
    out_shape = [jax.ShapeDtypeStruct((bsz, tgt_len, embed_dim), query.dtype)]
    if need_weights:
        out_specs.append(pl.BlockSpec((batch_block, tgt_len, src_len),
                                      lambda b: (b, 0, 0)))
        out_shape.append(jax.ShapeDtypeStruct((bsz, tgt_len, src_len),
                                              jnp.float32))

    results = pl.pallas_call(
        kernel,
        out_shape=tuple(out_shape),
        grid_spec=pltpu.PrefetchScalarGridSpec(
            num_scalar_prefetch=0,
            grid=grid,
            in_specs=in_specs,
            out_specs=tuple(out_specs)),
        compiler_params=pltpu.CompilerParams(
            dimension_semantics=("parallel",)),
    )(q_h, k_h, v_h, w_head, b_full)

    if need_weights:
        return results[0], results[1]
    return results[0], None


def _reference(query, key, value, w1, b1, w2, b2, num_heads):
    """Pure-JAX reference mirroring the torch code, for a correctness check."""
    bsz, L, E = query.shape
    S = key.shape[1]
    Dh = E // num_heads
    scaling = float(Dh) ** (-0.5)
    q = (query * scaling).reshape(bsz, L, num_heads, Dh).transpose(0, 2, 1, 3)
    k = key.reshape(bsz, S, num_heads, Dh).transpose(0, 2, 1, 3)
    v = value.reshape(bsz, S, num_heads, Dh).transpose(0, 2, 1, 3)
    s = jnp.einsum('bhld,bhsd->bhls', q, k)
    p = jax.nn.softmax(s, axis=-1)
    o = jnp.einsum('bhls,bhsd->bhld', p, v)          # (B, H, L, Dh)
    half = Dh // 2
    o1 = o[..., :half].transpose(0, 2, 1, 3).reshape(bsz, L, num_heads * half)
    o2 = o[..., half:].transpose(0, 2, 1, 3).reshape(bsz, L, num_heads * half)
    y1 = o1 @ w1.T + b1
    y2 = o2 @ w2.T + b2
    out = jnp.concatenate([y1, y2], axis=-1)
    wts = p.sum(axis=1) / num_heads
    return out, wts


if __name__ == "__main__":
    # Small shapes consistent with the module
    bsz, tgt_len, src_len = 2, 8, 10
    embed_dim, num_heads = 32, 4
    half_embed = embed_dim // 2

    key0 = jax.random.PRNGKey(0)
    kq, kk, kv, kw1, kw2 = jax.random.split(key0, 5)

    query = jax.random.normal(kq, (bsz, tgt_len, embed_dim), dtype=jnp.float32)
    key_ = jax.random.normal(kk, (bsz, src_len, embed_dim), dtype=jnp.float32)
    value = jax.random.normal(kv, (bsz, src_len, embed_dim), dtype=jnp.float32)

    # out_proj1 / out_proj2: (E/2, E/2) weights, biases = 0 (per _reset_parameters)
    bound = 1.0 / (half_embed ** 0.5)
    w1 = jax.random.uniform(kw1, (half_embed, half_embed), jnp.float32, -bound, bound)
    w2 = jax.random.uniform(kw2, (half_embed, half_embed), jnp.float32, -bound, bound)
    b1 = jnp.zeros((half_embed,), jnp.float32)
    b2 = jnp.zeros((half_embed,), jnp.float32)

    # default: grid parallel over batch (keeps both v7x TCs busy)
    out, wts = modified_multihead_attention(query, key_, value, w1, b1, w2, b2,
                                            num_heads=num_heads)
    # batch-blocked variant: one grid step covers the whole batch
    # (amortizes per-step overhead on single-TC v5e/v6e)
    out_bb, wts_bb = modified_multihead_attention(query, key_, value, w1, b1, w2, b2,
                                                  num_heads=num_heads, batch_block=2)
    # need_weights=False variant: skips the (N, L, S) output entirely
    out_nw, wts_nw = modified_multihead_attention(query, key_, value, w1, b1, w2, b2,
                                                  num_heads=num_heads,
                                                  need_weights=False)
    jax.block_until_ready((out, wts, out_bb, wts_bb, out_nw))

    ref_out, ref_wts = _reference(query, key_, value, w1, b1, w2, b2, num_heads)
    assert out.shape == (bsz, tgt_len, embed_dim)
    assert wts.shape == (bsz, tgt_len, src_len)
    assert wts_nw is None

    # slightly loose tolerance: softmax denominator uses the EUP approx reciprocal
    tol = dict(atol=2e-3, rtol=2e-3)
    assert jnp.allclose(out, ref_out, **tol)
    assert jnp.allclose(wts, ref_wts, **tol)
    assert jnp.allclose(out_bb, ref_out, **tol)
    assert jnp.allclose(wts_bb, ref_wts, **tol)
    assert jnp.allclose(out_nw, ref_out, **tol)

    print("KERNEL_OK")
</pallas_src>

<mosaic_0001>
module attributes {stable_mosaic.version = 11 : i64} {
  func.func @_mha_kernel(%arg0: i32, %arg1: memref<1x4x8x8xf32, #tpu.memory_space<vmem>>, %arg2: memref<1x4x10x8xf32, #tpu.memory_space<vmem>>, %arg3: memref<1x4x10x8xf32, #tpu.memory_space<vmem>>, %arg4: memref<4x8x32xf32, #tpu.memory_space<vmem>>, %arg5: memref<1x32xf32, #tpu.memory_space<vmem>>, %arg6: memref<1x8x32xf32, #tpu.memory_space<vmem>>, %arg7: memref<1x8x10xf32, #tpu.memory_space<vmem>>) attributes {dimension_semantics = [#tpu.dimension_semantics<parallel>], iteration_bounds = array<i64: 2>, scalar_prefetch = 0 : i64, scratch_operands = 0 : i64, tpu.core_type = #tpu.core_type<tc>, window_params = [{transform_indices = @transform_0, window_bounds = array<i64: 1, 4, 8, 8>}, {transform_indices = @transform_1, window_bounds = array<i64: 1, 4, 10, 8>}, {transform_indices = @transform_2, window_bounds = array<i64: 1, 4, 10, 8>}, {pipeline_mode = #tpu.pipeline_mode<synchronous>, transform_indices = @transform_3, window_bounds = array<i64: 4, 8, 32>}, {pipeline_mode = #tpu.pipeline_mode<synchronous>, transform_indices = @transform_4, window_bounds = array<i64: 1, 32>}, {transform_indices = @transform_5, window_bounds = array<i64: 1, 8, 32>}, {transform_indices = @transform_6, window_bounds = array<i64: 1, 8, 10>}]} {
    %c0 = arith.constant 0 : index
    %c0_0 = arith.constant 0 : index
    %c0_1 = arith.constant 0 : index
    %0 = vector.load %arg4[%c0, %c0_0, %c0_1] : memref<4x8x32xf32, #tpu.memory_space<vmem>>, vector<4x8x32xf32>
    %c0_2 = arith.constant 0 : index
    %c0_3 = arith.constant 0 : index
    %1 = vector.load %arg5[%c0_2, %c0_3] : memref<1x32xf32, #tpu.memory_space<vmem>>, vector<1x32xf32>
    %c0_4 = arith.constant 0 : index
    %c0_5 = arith.constant 0 : index
    %c0_6 = arith.constant 0 : index
    %c0_7 = arith.constant 0 : index
    %2 = vector.load %arg1[%c0_4, %c0_5, %c0_6, %c0_7] : memref<1x4x8x8xf32, #tpu.memory_space<vmem>>, vector<1x4x8x8xf32>
    %3 = vector.shape_cast %2 : vector<1x4x8x8xf32> to vector<4x8x8xf32>
    %cst = arith.constant 0.353553385 : f32
    %4 = vector.broadcast %cst : f32 to vector<4x8x8xf32>
    %5 = arith.mulf %3, %4 : vector<4x8x8xf32>
    %c0_8 = arith.constant 0 : index
    %c0_9 = arith.constant 0 : index
    %c0_10 = arith.constant 0 : index
    %c0_11 = arith.constant 0 : index
    %6 = vector.load %arg2[%c0_8, %c0_9, %c0_10, %c0_11] : memref<1x4x10x8xf32, #tpu.memory_space<vmem>>, vector<1x4x10x8xf32>
    %7 = vector.shape_cast %6 : vector<1x4x10x8xf32> to vector<4x10x8xf32>
    %c0_12 = arith.constant 0 : index
    %c0_13 = arith.constant 0 : index
    %c0_14 = arith.constant 0 : index
    %c0_15 = arith.constant 0 : index
    %8 = vector.load %arg3[%c0_12, %c0_13, %c0_14, %c0_15] : memref<1x4x10x8xf32, #tpu.memory_space<vmem>>, vector<1x4x10x8xf32>
    %9 = vector.shape_cast %8 : vector<1x4x10x8xf32> to vector<4x10x8xf32>
    "tpu.trace_start"() <{level = 10 : i32, message = "hld,hsd->hls"}> : () -> ()
    %cst_16 = arith.constant dense<0.000000e+00> : vector<4x8x10xf32>
    %10 = tpu.matmul %5, %7, %cst_16 {dimension_numbers = #tpu.dot_dimension_numbers<[2], [2], [1], [1], [0, 0, 0, 1, 1, 1], [0], [0]>} : vector<4x8x8xf32>, vector<4x10x8xf32>, vector<4x8x10xf32> -> vector<4x8x10xf32>
    "tpu.trace_stop"() : () -> ()
    %cst_17 = arith.constant dense<0xFF800000> : vector<4x8xf32>
    %11 = vector.multi_reduction <maximumf>, %10, %cst_17 [2] : vector<4x8x10xf32> to vector<4x8xf32>
    %12 = vector.shape_cast %11 : vector<4x8xf32> to vector<4x8x1xf32>
    %13 = vector.broadcast %12 : vector<4x8x1xf32> to vector<4x8x10xf32>
    %14 = arith.subf %10, %13 : vector<4x8x10xf32>
    %15 = math.exp %14 : vector<4x8x10xf32>
    %cst_18 = arith.constant dense<0.000000e+00> : vector<4x8xf32>
    %16 = vector.multi_reduction <add>, %15, %cst_18 [2] : vector<4x8x10xf32> to vector<4x8xf32>
    %17 = vector.shape_cast %16 : vector<4x8xf32> to vector<4x8x1xf32>
    %18 = tpu.reciprocal %17 {approx = true} : vector<4x8x1xf32> -> vector<4x8x1xf32>
    %19 = vector.broadcast %18 : vector<4x8x1xf32> to vector<4x8x10xf32>
    %20 = arith.mulf %15, %19 : vector<4x8x10xf32>
    "tpu.trace_start"() <{level = 10 : i32, message = "hls,hsd->hld"}> : () -> ()
    %cst_19 = arith.constant dense<0.000000e+00> : vector<4x8x8xf32>
    %21 = tpu.matmul %20, %9, %cst_19 {dimension_numbers = #tpu.dot_dimension_numbers<[2], [1], [1], [2], [0, 0, 0, 1, 1, 2], [0], [0]>} : vector<4x8x10xf32>, vector<4x10x8xf32>, vector<4x8x8xf32> -> vector<4x8x8xf32>
    "tpu.trace_stop"() : () -> ()
    "tpu.trace_start"() <{level = 10 : i32, message = "hld,hde->hle"}> : () -> ()
    %cst_20 = arith.constant dense<0.000000e+00> : vector<4x8x32xf32>
    %22 = tpu.matmul %21, %0, %cst_20 {dimension_numbers = #tpu.dot_dimension_numbers<[2], [1], [1], [2], [0, 0, 0, 1, 1, 2], [0], [0]>} : vector<4x8x8xf32>, vector<4x8x32xf32>, vector<4x8x32xf32> -> vector<4x8x32xf32>
    "tpu.trace_stop"() : () -> ()
    %cst_21 = arith.constant dense<0.000000e+00> : vector<8x32xf32>
    %23 = vector.multi_reduction <add>, %22, %cst_21 [0] : vector<4x8x32xf32> to vector<8x32xf32>
    %24 = vector.broadcast %1 : vector<1x32xf32> to vector<8x32xf32>
    %25 = arith.addf %23, %24 : vector<8x32xf32>
    %c0_22 = arith.constant 0 : index
    %c0_23 = arith.constant 0 : index
    %c0_24 = arith.constant 0 : index
    %26 = vector.load %arg6[%c0_22, %c0_23, %c0_24] : memref<1x8x32xf32, #tpu.memory_space<vmem>>, vector<1x8x32xf32>
    %27 = vector.shape_cast %26 : vector<1x8x32xf32> to vector<8x32xf32>
    %28 = vector.shape_cast %25 : vector<8x32xf32> to vector<1x8x32xf32>
    tpu.vector_store %arg6[%c0_22, %c0_23, %c0_24], %28 {strides = array<i32>} : memref<1x8x32xf32, #tpu.memory_space<vmem>>, vector<1x8x32xf32>,
    %cst_25 = arith.constant dense<0.000000e+00> : vector<8x10xf32>
    %29 = vector.multi_reduction <add>, %20, %cst_25 [0] : vector<4x8x10xf32> to vector<8x10xf32>
    %cst_26 = arith.constant 2.500000e-01 : f32
    %30 = vector.broadcast %cst_26 : f32 to vector<8x10xf32>
    %31 = arith.mulf %29, %30 : vector<8x10xf32>
    %c0_27 = arith.constant 0 : index
    %c0_28 = arith.constant 0 : index
    %c0_29 = arith.constant 0 : index
    %32 = vector.load %arg7[%c0_27, %c0_28, %c0_29] : memref<1x8x10xf32, #tpu.memory_space<vmem>>, vector<1x8x10xf32>
    %33 = vector.shape_cast %32 : vector<1x8x10xf32> to vector<8x10xf32>
    %34 = vector.shape_cast %31 : vector<8x10xf32> to vector<1x8x10xf32>
    tpu.vector_store %arg7[%c0_27, %c0_28, %c0_29], %34 {strides = array<i32>} : memref<1x8x10xf32, #tpu.memory_space<vmem>>, vector<1x8x10xf32>,
    return
  }
  func.func @transform_0(%arg0: i32) -> (i32, i32, i32, i32) {
    %c0_i32 = arith.constant 0 : i32
    %c0_i32_0 = arith.constant 0 : i32
    %c0_i32_1 = arith.constant 0 : i32
    %c0_i32_2 = arith.constant 0 : i32
    return %arg0, %c0_i32, %c0_i32_0, %c0_i32_1 : i32, i32, i32, i32
  }
  func.func @transform_1(%arg0: i32) -> (i32, i32, i32, i32) {
    %c0_i32 = arith.constant 0 : i32
    %c0_i32_0 = arith.constant 0 : i32
    %c0_i32_1 = arith.constant 0 : i32
    %c0_i32_2 = arith.constant 0 : i32
    return %arg0, %c0_i32, %c0_i32_0, %c0_i32_1 : i32, i32, i32, i32
  }
  func.func @transform_2(%arg0: i32) -> (i32, i32, i32, i32) {
    %c0_i32 = arith.constant 0 : i32
    %c0_i32_0 = arith.constant 0 : i32
    %c0_i32_1 = arith.constant 0 : i32
    %c0_i32_2 = arith.constant 0 : i32
    return %arg0, %c0_i32, %c0_i32_0, %c0_i32_1 : i32, i32, i32, i32
  }
  func.func @transform_3(%arg0: i32) -> (i32, i32, i32) {
    %c0_i32 = arith.constant 0 : i32
    %c0_i32_0 = arith.constant 0 : i32
    %c0_i32_1 = arith.constant 0 : i32
    %c0_i32_2 = arith.constant 0 : i32
    return %c0_i32, %c0_i32_0, %c0_i32_1 : i32, i32, i32
  }
  func.func @transform_4(%arg0: i32) -> (i32, i32) {
    %c0_i32 = arith.constant 0 : i32
    %c0_i32_0 = arith.constant 0 : i32
    %c0_i32_1 = arith.constant 0 : i32
    return %c0_i32, %c0_i32_0 : i32, i32
  }
  func.func @transform_5(%arg0: i32) -> (i32, i32, i32) {
    %c0_i32 = arith.constant 0 : i32
    %c0_i32_0 = arith.constant 0 : i32
    %c0_i32_1 = arith.constant 0 : i32
    return %arg0, %c0_i32, %c0_i32_0 : i32, i32, i32
  }
  func.func @transform_6(%arg0: i32) -> (i32, i32, i32) {
    %c0_i32 = arith.constant 0 : i32
    %c0_i32_0 = arith.constant 0 : i32
    %c0_i32_1 = arith.constant 0 : i32
    return %arg0, %c0_i32, %c0_i32_0 : i32, i32, i32
  }
}

</mosaic_0001>

<llo_original>
// kernel: tpu_custom_call.1
$region0: #{tpu_custom_call.1}
  #allocation0 [shape = 'u32[]', space=smem, size = 0x4, offset = 0x4, fixed_abs, tag = 'smem constant byte address 0x4 - core index']
  #allocation1 [shape = 'u32[144,128]{1,0:T(1,128)}', space=vmem, size = 0x12000, scoped, tag = 'internal scratch']
  %s0 = inlined_call_operand.vmem [shape: f32[2,4,8,8], index: 0, kind: input, shape index: {}]
  %s1 = inlined_call_operand.vmem [shape: f32[2,4,10,8], index: 1, kind: input, shape index: {}]
  %s2 = inlined_call_operand.vmem [shape: f32[2,4,10,8], index: 2, kind: input, shape index: {}]
  %s3 = inlined_call_operand.vmem [shape: f32[4,8,32], index: 3, kind: input, shape index: {}]
  %s4 = inlined_call_operand.vmem [shape: f32[1,32], index: 4, kind: input, shape index: {}]
  %s5 = inlined_call_operand.hbm [shape: f32[2,8,32], index: 5, kind: output, shape index: {0}]
  %s6 = inlined_call_operand.hbm [shape: f32[2,8,10], index: 6, kind: output, shape index: {1}]
  %7 = xla_tuple %s5, %s6
  %s8 = sld [smem:[#allocation0]]
  $region61: #{tpu_custom_call.1} parent=0
    _
  %s10 = ssub.s32 1, %s8
  %s11 = scalar_select 0, %s10, %s8
  $region1: #{tpu_custom_call.1} parent=0
    #allocation2 [shape = 'u8[8192]{0}', space=vmem, size = 0x2000, scoped, tag = 'output window, operand 0']
    #allocation3 [shape = 's32[2]{0}', space=sflag, size = 0x8, scoped, tag = 'scoped memory for tpu_custom_call.1']
    #allocation4 [shape = 'u8[8192]{0}', space=vmem, size = 0x2000, scoped, tag = 'output window, operand 1']
    #allocation5 [shape = 's32[2]{0}', space=sflag, size = 0x8, scoped, tag = 'scoped memory for tpu_custom_call.1']
    %12 = vsyncpa [#allocation3], 0
    %s13 = scalar_lea.sflag [#allocation3], 1
    %14 = vsyncpa %s13, 0
    %15 = vsyncpa [#allocation5], 0
    %s16 = scalar_lea.sflag [#allocation5], 1
    %17 = vsyncpa %s16, 0
    loop: start=0, step=1, limit=4
    $region2: #{tpu_custom_call.1} parent=1 // loop_pre_header
      _
    $region3: #{tpu_custom_call.1} parent=1 // loop_header
      %s19 = sphi 0, %s23
      %p20 = scmp.ge.s32.totalorder %s19, 4
      %s29 = sphi 0, %s31
      %s32 = sphi 0, %s29
      %s33 = sphi 0, %s32
      %s49 = sphi 0, %s33
      %s55 = sphi 0, %s57
      %s58 = sphi 0, %s55
      %s59 = sphi 0, %s58
      %s75 = sphi 0, %s59
      %s81 = sphi 0, %s83
      %s84 = sphi 0, %s81
      %s85 = sphi 0, %s84
      %s101 = sphi 0, %s85
      %s105 = sphi 0, %s105
      %s107 = sphi 0, %s105
      %s108 = sphi 0, %s107
      %s122 = sphi 0, %s108
      %s126 = sphi 0, %s126
      %s128 = sphi 0, %s126
      %s129 = sphi 0, %s128
      %s143 = sphi 0, %s129
      %s149 = sphi 0, %s151
      %s152 = sphi 0, %s149
      %s153 = sphi 0, %s152
      %s169 = sphi 0, %s153
      %s175 = sphi 0, %s177
      %s178 = sphi 0, %s175
      %s179 = sphi 0, %s178
      %s195 = sphi 0, %s179
    $region4: #{tpu_custom_call.1} parent=1 // loop_header_branch
      %22 = sbr.rel (%p20) target = $region8
    $region5: #{tpu_custom_call.1} parent=1 // loop_body
      %s24 = ssub.s32 %s19, 1
      %s25 = ssub.s32 %s19, 2
      %s26 = sadd.s32 %s19, 1
      %s27 = ssub.s32 %s19, %s26
      %p28 = scmp.eq.s32.totalorder %s27, 0
      %s30 = sadd.s32 %s29, 1
      %s31 = scalar_select %p28, %s29, %s30
      %p34 = pneg %p28
      %p35 = scmp.eq.s32.totalorder %s19, 1
      %p36 = por %p34, %p35
      %p37 = scmp.ne.s32.totalorder %s29, %s32
      %p38 = scmp.eq.s32.totalorder %s19, 0
      %p39 = por %p37, %p38
      %p40 = scmp.ne.s32.totalorder %s29, %s32
      %p41 = scmp.eq.s32.totalorder %s24, 1
      %p42 = por %p40, %p41
      %p43 = scmp.ne.s32.totalorder %s32, %s33
      %p44 = scmp.eq.s32.totalorder %s24, 0
      %p45 = por %p43, %p44
      %p46 = scmp.ne.s32.totalorder %s32, %s33
      %p47 = scmp.eq.s32.totalorder %s25, 1
      %p48 = por %p46, %p47
      %p50 = scmp.ne.s32.totalorder %s33, %s49
      %p51 = scmp.eq.s32.totalorder %s25, 0
      %p52 = por %p50, %p51
      %s53 = ssub.s32 %s19, %s26
      %p54 = scmp.eq.s32.totalorder %s53, 0
      %s56 = sadd.s32 %s55, 1
      %s57 = scalar_select %p54, %s55, %s56
      %p60 = pneg %p54
      %p61 = scmp.eq.s32.totalorder %s19, 1
      %p62 = por %p60, %p61
      %p63 = scmp.ne.s32.totalorder %s55, %s58
      %p64 = scmp.eq.s32.totalorder %s19, 0
      %p65 = por %p63, %p64
      %p66 = scmp.ne.s32.totalorder %s55, %s58
      %p67 = scmp.eq.s32.totalorder %s24, 1
      %p68 = por %p66, %p67
      %p69 = scmp.ne.s32.totalorder %s58, %s59
      %p70 = scmp.eq.s32.totalorder %s24, 0
      %p71 = por %p69, %p70
      %p72 = scmp.ne.s32.totalorder %s58, %s59
      %p73 = scmp.eq.s32.totalorder %s25, 1
      %p74 = por %p72, %p73
      %p76 = scmp.ne.s32.totalorder %s59, %s75
      %p77 = scmp.eq.s32.totalorder %s25, 0
      %p78 = por %p76, %p77
      %s79 = ssub.s32 %s19, %s26
      %p80 = scmp.eq.s32.totalorder %s79, 0
      %s82 = sadd.s32 %s81, 1
      %s83 = scalar_select %p80, %s81, %s82
      %p86 = pneg %p80
      %p87 = scmp.eq.s32.totalorder %s19, 1
      %p88 = por %p86, %p87
      %p89 = scmp.ne.s32.totalorder %s81, %s84
      %p90 = scmp.eq.s32.totalorder %s19, 0
      %p91 = por %p89, %p90
      %p92 = scmp.ne.s32.totalorder %s81, %s84
      %p93 = scmp.eq.s32.totalorder %s24, 1
      %p94 = por %p92, %p93
      %p95 = scmp.ne.s32.totalorder %s84, %s85
      %p96 = scmp.eq.s32.totalorder %s24, 0
      %p97 = por %p95, %p96
      %p98 = scmp.ne.s32.totalorder %s84, %s85
      %p99 = scmp.eq.s32.totalorder %s25, 1
      %p100 = por %p98, %p99
      %p102 = scmp.ne.s32.totalorder %s85, %s101
      %p103 = scmp.eq.s32.totalorder %s25, 0
      %p104 = por %p102, %p103
      %s106 = sadd.s32 %s105, 1
      %p109 = scmp.eq.s32.totalorder %s19, 1
      %p110 = scmp.ne.s32.totalorder %s105, %s107
      %p111 = scmp.eq.s32.totalorder %s19, 0
      %p112 = por %p110, %p111
      %p113 = scmp.ne.s32.totalorder %s105, %s107
      %p114 = scmp.eq.s32.totalorder %s24, 1
      %p115 = por %p113, %p114
      %p116 = scmp.ne.s32.totalorder %s107, %s108
      %p117 = scmp.eq.s32.totalorder %s24, 0
      %p118 = por %p116, %p117
      %p119 = scmp.ne.s32.totalorder %s107, %s108
      %p120 = scmp.eq.s32.totalorder %s25, 1
      %p121 = por %p119, %p120
      %p123 = scmp.ne.s32.totalorder %s108, %s122
      %p124 = scmp.eq.s32.totalorder %s25, 0
      %p125 = por %p123, %p124
      %s127 = sadd.s32 %s126, 1
      %p130 = scmp.eq.s32.totalorder %s19, 1
      %p131 = scmp.ne.s32.totalorder %s126, %s128
      %p132 = scmp.eq.s32.totalorder %s19, 0
      %p133 = por %p131, %p132
      %p134 = scmp.ne.s32.totalorder %s126, %s128
      %p135 = scmp.eq.s32.totalorder %s24, 1
      %p136 = por %p134, %p135
      %p137 = scmp.ne.s32.totalorder %s128, %s129
      %p138 = scmp.eq.s32.totalorder %s24, 0
      %p139 = por %p137, %p138
      %p140 = scmp.ne.s32.totalorder %s128, %s129
      %p141 = scmp.eq.s32.totalorder %s25, 1
      %p142 = por %p140, %p141
      %p144 = scmp.ne.s32.totalorder %s129, %s143
      %p145 = scmp.eq.s32.totalorder %s25, 0
      %p146 = por %p144, %p145
      %s147 = ssub.s32 %s19, %s26
      %p148 = scmp.eq.s32.totalorder %s147, 0
      %s150 = sadd.s32 %s149, 1
      %s151 = scalar_select %p148, %s149, %s150
      %p154 = pneg %p148
      %p155 = scmp.eq.s32.totalorder %s19, 1
      %p156 = por %p154, %p155
      %p157 = scmp.ne.s32.totalorder %s149, %s152
      %p158 = scmp.eq.s32.totalorder %s19, 0
      %p159 = por %p157, %p158
      %p160 = scmp.ne.s32.totalorder %s149, %s152
      %p161 = scmp.eq.s32.totalorder %s24, 1
      %p162 = por %p160, %p161
      %p163 = scmp.ne.s32.totalorder %s152, %s153
      %p164 = scmp.eq.s32.totalorder %s24, 0
      %p165 = por %p163, %p164
      %p166 = scmp.ne.s32.totalorder %s152, %s153
      %p167 = scmp.eq.s32.totalorder %s25, 1
      %p168 = por %p166, %p167
      %p170 = scmp.ne.s32.totalorder %s153, %s169
      %p171 = scmp.eq.s32.totalorder %s25, 0
      %p172 = por %p170, %p171
      %s173 = ssub.s32 %s19, %s26
      %p174 = scmp.eq.s32.totalorder %s173, 0
      %s176 = sadd.s32 %s175, 1
      %s177 = scalar_select %p174, %s175, %s176
      %p180 = pneg %p174
      %p181 = scmp.eq.s32.totalorder %s19, 1
      %p182 = por %p180, %p181
      %p183 = scmp.ne.s32.totalorder %s175, %s178
      %p184 = scmp.eq.s32.totalorder %s19, 0
      %p185 = por %p183, %p184
      %p186 = scmp.ne.s32.totalorder %s175, %s178
      %p187 = scmp.eq.s32.totalorder %s24, 1
      %p188 = por %p186, %p187
      %p189 = scmp.ne.s32.totalorder %s178, %s179
      %p190 = scmp.eq.s32.totalorder %s24, 0
      %p191 = por %p189, %p190
      %p192 = scmp.ne.s32.totalorder %s178, %s179
      %p193 = scmp.eq.s32.totalorder %s25, 1
      %p194 = por %p192, %p193
      %p196 = scmp.ne.s32.totalorder %s179, %s195
      %p197 = scmp.eq.s32.totalorder %s25, 0
      %p198 = por %p196, %p197
      %p199 = scmp.le.s32.totalorder 1, %s19
      %p200 = scmp.lt.s32.totalorder %s19, 3
      %p201 = pnand %p199, %p200
      %p202 = pneg %p201
      // Predicated region
      $region9: #{tpu_custom_call.1} parent=5 // pred_check
        _
      $region10: #{tpu_custom_call.1} parent=5 // pred_check_branch
        %204 = sbr.rel (%p201) target = $region12
      $region11: #{tpu_custom_call.1} parent=5 // pred_region
        %s205 = ssub.s32 %s19, 1
        // Predicated region
        $region13: #{tpu_custom_call.1} parent=11 // pred_check
          %p206 = pneg %p118
        $region14: #{tpu_custom_call.1} parent=11 // pred_check_branch
          %208 = sbr.rel (%p206) target = $region16
        $region15: #{tpu_custom_call.1} parent=11 // pred_region
          _
        $region16: #{tpu_custom_call.1} parent=11 // pred_fallthru
          _
        // Predicated region
        $region17: #{tpu_custom_call.1} parent=11 // pred_check
          %p209 = pneg %p139
        $region18: #{tpu_custom_call.1} parent=11 // pred_check_branch
          %211 = sbr.rel (%p209) target = $region20
        $region19: #{tpu_custom_call.1} parent=11 // pred_region
          _
        $region20: #{tpu_custom_call.1} parent=11 // pred_fallthru
          _
      $region12: #{tpu_custom_call.1} parent=5 // pred_fallthru
        _
      %p212 = scmp.lt.s32.totalorder %s19, 2
      // Predicated region
      $region21: #{tpu_custom_call.1} parent=5 // pred_check
        %p213 = pneg %p212
      $region22: #{tpu_custom_call.1} parent=5 // pred_check_branch
        %215 = sbr.rel (%p213) target = $region24
      $region23: #{tpu_custom_call.1} parent=5 // pred_region
        // Predicated region
        $region25: #{tpu_custom_call.1} parent=23 // pred_check
          %p216 = pneg %p39
        $region26: #{tpu_custom_call.1} parent=23 // pred_check_branch
          %218 = sbr.rel (%p216) target = $region28
        $region27: #{tpu_custom_call.1} parent=23 // pred_region
          %p219 = scmp.lt.s32.totalorder %s19, 1
          %s220 = scalar_select %p219, %s19, 1
          %s221 = smul.addr %s220, 4
          %s222 = smul.addr %s221, 8
          %s223 = scalar_lea.vmem %s0, %s222
        $region28: #{tpu_custom_call.1} parent=23 // pred_fallthru
          _
        // Predicated region
        $region29: #{tpu_custom_call.1} parent=23 // pred_check
          %p224 = pneg %p65
        $region30: #{tpu_custom_call.1} parent=23 // pred_check_branch
          %226 = sbr.rel (%p224) target = $region32
        $region31: #{tpu_custom_call.1} parent=23 // pred_region
          %p227 = scmp.lt.s32.totalorder %s19, 1
          %s228 = scalar_select %p227, %s19, 1
          %s229 = smul.addr %s228, 8
          %s230 = smul.addr %s229, 8
          %s231 = scalar_lea.vmem %s1, %s230
        $region32: #{tpu_custom_call.1} parent=23 // pred_fallthru
          _
        // Predicated region
        $region33: #{tpu_custom_call.1} parent=23 // pred_check
          %p232 = pneg %p91
        $region34: #{tpu_custom_call.1} parent=23 // pred_check_branch
          %234 = sbr.rel (%p232) target = $region36
        $region35: #{tpu_custom_call.1} parent=23 // pred_region
          %p235 = scmp.lt.s32.totalorder %s19, 1
          %s236 = scalar_select %p235, %s19, 1
          %s237 = smul.addr %s236, 8
          %s238 = smul.addr %s237, 8
          %s239 = scalar_lea.vmem %s2, %s238
        $region36: #{tpu_custom_call.1} parent=23 // pred_fallthru
          _
      $region24: #{tpu_custom_call.1} parent=5 // pred_fallthru
        _
      %p240 = scmp.le.s32.totalorder 1, %s19
      %p241 = scmp.lt.s32.totalorder %s19, 3
      %p242 = pnand %p240, %p241
      %p243 = pneg %p242
      // Predicated region
      $region37: #{tpu_custom_call.1} parent=5 // pred_check
        _
      $region38: #{tpu_custom_call.1} parent=5 // pred_check_branch
        %245 = sbr.rel (%p242) target = $region40
      $region39: #{tpu_custom_call.1} parent=5 // pred_region
        %s246 = ssub.s32 %s19, 1
        %p247 = scmp.lt.s32.totalorder %s24, 1
        %s248 = scalar_select %p247, %s24, 1
        %s249 = smul.addr %s248, 4
        %s250 = smul.addr %s249, 8
        %s251 = scalar_lea.vmem %s0, %s250
        %p252 = pneg %p45
        %p253 = pneg %p42
        %p254 = scmp.lt.s32.totalorder %s24, 1
        %s255 = scalar_select %p254, %s24, 1
        %s256 = smul.addr %s255, 8
        %s257 = smul.addr %s256, 8
        %s258 = scalar_lea.vmem %s1, %s257
        %p259 = pneg %p71
        %p260 = pneg %p68
        %p261 = scmp.lt.s32.totalorder %s24, 1
        %s262 = scalar_select %p261, %s24, 1
        %s263 = smul.addr %s262, 8
        %s264 = smul.addr %s263, 8
        %s265 = scalar_lea.vmem %s2, %s264
        %p266 = pneg %p97
        %p267 = pneg %p94
        %p268 = pneg %p118
        %p269 = pneg %p115
        %p270 = pneg %p139
        %p271 = pneg %p136
        %p272 = pneg %p165
        %p273 = pneg %p162
        %s274 = sand.u32 %s152, 1
        %s275 = scalar_lea.sflag [#allocation3], %s274
        %s276 = sand.u32 %s152, 1
        %s277 = smul.addr %s276, 8
        %s278 = scalar_lea.vmem [#allocation2], %s277
        %p279 = pneg %p191
        %p280 = pneg %p188
        %s281 = sand.u32 %s178, 1
        %s282 = scalar_lea.sflag [#allocation5], %s281
        %s283 = sand.u32 %s178, 1
        %s284 = smul.addr %s283, 8
        %s285 = scalar_lea.vmem [#allocation4], %s284
        %p286 = scmp.lt.s32.totalorder %s24, 1
        %s287 = scalar_select %p286, %s24, 1
        %s288 = smul.addr %s287, 4
        %s289 = smul.addr %s288, 8
        %s290 = scalar_lea.vmem %s0, %s289
        %p291 = scmp.lt.s32.totalorder %s24, 1
        %s292 = scalar_select %p291, %s24, 1
        %s293 = smul.addr %s292, 8
        %s294 = smul.addr %s293, 8
        %s295 = scalar_lea.vmem %s1, %s294
        %p296 = scmp.lt.s32.totalorder %s24, 1
        %s297 = scalar_select %p296, %s24, 1
        %s298 = smul.addr %s297, 8
        %s299 = smul.addr %s298, 8
        %s300 = scalar_lea.vmem %s2, %s299
        %v301 = vld [vmem:[%s3] sm:$0xff]
        %v302 = vld [vmem:[%s3 + $0x8] sm:$0xff]
        %v303 = vld [vmem:[%s3 + $0x10] sm:$0xff]
        %v304 = vld [vmem:[%s3 + $0x18] sm:$0xff]
        %v305 = vld [vmem:[%s4] sm:$0x1]
        %v306 = vld [vmem:[%s290] sm:$0xff]
        %v307 = vld [vmem:[%s290 + $0x8] sm:$0xff]
        %v308 = vld [vmem:[%s290 + $0x10] sm:$0xff]
        %v309 = vld [vmem:[%s290 + $0x18] sm:$0xff]
        %v310 = vmul.f32 %v306, 0.35355338
        %v311 = vmul.f32 %v307, 0.35355338
        %v312 = vmul.f32 %v308, 0.35355338
        %v313 = vmul.f32 %v309, 0.35355338
        %v314 = vld [vmem:[%s295] sm:$0xff]
        %v315 = vld [vmem:[%s295 + $0x8] sm:$0x3]
        %v316 = vld [vmem:[%s295 + $0x10] sm:$0xff]
        %v317 = vld [vmem:[%s295 + $0x18] sm:$0x3]
        %v318 = vld [vmem:[%s295 + $0x20] sm:$0xff]
        %v319 = vld [vmem:[%s295 + $0x28] sm:$0x3]
        %v320 = vld [vmem:[%s295 + $0x30] sm:$0xff]
        %v321 = vld [vmem:[%s295 + $0x38] sm:$0x3]
        %v322 = vld [vmem:[%s300] sm:$0xff]
        %v323 = vld [vmem:[%s300 + $0x8] sm:$0x3]
        %v324 = vld [vmem:[%s300 + $0x10] sm:$0xff]
        %v325 = vld [vmem:[%s300 + $0x18] sm:$0x3]
        %v326 = vld [vmem:[%s300 + $0x20] sm:$0xff]
        %v327 = vld [vmem:[%s300 + $0x28] sm:$0x3]
        %v328 = vld [vmem:[%s300 + $0x30] sm:$0xff]
        %v329 = vld [vmem:[%s300 + $0x38] sm:$0x3]
        %vm330 = vcmask 64512
        %v332 = vsel %vm330, %v310, 0
        %v335 = vsel %vm330, %v314, 0
        %v338 = vsel %vm330, %v315, 0
        %340 = vmatprep.subr.mxu0 0.0
        %341 = vmatpush1.xpose.msra.mxu0 %v335
        %342 = vmatprep.subr.mxu0 0.0
        %343 = vmatpush1.xpose.msra.mxu0 %v338
        %344 = vmatprep.subr.mxu0 0.0
        %345 = vmatpush1.xpose.msra.mxu0 0.0
        %346 = vmatprep.subr.mxu0 0.0
        %347 = vmatpush1.xpose.msra.mxu0 0.0
        %348 = vmatprep.subr.mxu0 0.0
        %349 = vmatpush1.xpose.msra.mxu0 0.0
        %350 = vmatprep.subr.mxu0 0.0
        %351 = vmatpush1.xpose.msra.mxu0 0.0
        %352 = vmatprep.subr.mxu0 0.0
        %353 = vmatpush1.xpose.msra.mxu0 0.0
        %354 = vmatprep.subr.mxu0 0.0
        %355 = vmatpush1.xpose.msra.mxu0 0.0
        %356 = vmatprep.subr.mxu0 0.0
        %357 = vmatpush1.xpose.msra.mxu0 0.0
        %358 = vmatprep.subr.mxu0 0.0
        %359 = vmatpush1.xpose.msra.mxu0 0.0
        %360 = vmatprep.subr.mxu0 0.0
        %361 = vmatpush1.xpose.msra.mxu0 0.0
        %362 = vmatprep.subr.mxu0 0.0
        %363 = vmatpush1.xpose.msra.mxu0 0.0
        %364 = vmatprep.subr.mxu0 0.0
        %365 = vmatpush1.xpose.msra.mxu0 0.0
        %366 = vmatprep.subr.mxu0 0.0
        %367 = vmatpush1.xpose.msra.mxu0 0.0
        %368 = vmatprep.subr.mxu0 0.0
        %369 = vmatpush1.xpose.msra.mxu0 0.0
        %370 = vmatprep.subr.mxu0 0.0
        %371 = vmatpush1.xpose.msra.mxu0 0.0
        %372 = vmatprep.subr.mxu0 0.0
        %373 = vmatpush1.xpose.msra.mxu0 0.0
        %374 = vmatprep.subr.mxu0 0.0
        %375 = vmatpush1.xpose.msra.mxu0 0.0
        %376 = vmatprep.subr.mxu0 0.0
        %377 = vmatpush1.xpose.msra.mxu0 0.0
        %378 = vmatprep.subr.mxu0 0.0
        %379 = vmatpush1.xpose.msra.mxu0 0.0
        %380 = vmatprep.subr.mxu0 0.0
        %381 = vmatpush1.xpose.msra.mxu0 0.0
        %382 = vmatprep.subr.mxu0 0.0
        %383 = vmatpush1.xpose.msra.mxu0 0.0
        %384 = vmatprep.subr.mxu0 0.0
        %385 = vmatpush1.xpose.msra.mxu0 0.0
        %386 = vmatprep.subr.mxu0 0.0
        %387 = vmatpush1.xpose.msra.mxu0 0.0
        %388 = vmatprep.subr.mxu0 0.0
        %389 = vmatpush1.xpose.msra.mxu0 0.0
        %390 = vmatprep.subr.mxu0 0.0
        %391 = vmatpush1.xpose.msra.mxu0 0.0
        %392 = vmatprep.subr.mxu0 0.0
        %393 = vmatpush1.xpose.msra.mxu0 0.0
        %394 = vmatprep.subr.mxu0 0.0
        %395 = vmatpush1.xpose.msra.mxu0 0.0
        %396 = vmatprep.subr.mxu0 0.0
        %397 = vmatpush1.xpose.msra.mxu0 0.0
        %398 = vmatprep.subr.mxu0 0.0
        %399 = vmatpush1.xpose.msra.mxu0 0.0
        %400 = vmatprep.subr.mxu0 0.0
        %401 = vmatpush1.xpose.msra.mxu0 0.0
        %402 = vmatprep.subr.mxu0 0.0
        %403 = vmatpush1.xpose.msra.mxu0 0.0
        %404 = vmatprep.mubr.f32.mxu0 0.0
        %405 = vmatmul.mubr.f32.gmra.mrb[0].mxu0 %v332
        %v406 = vpop.f32.mrb[0].mxu0
        %v407 = vadd.f32 0.0, %v406
        %v408 = vpop.f32.mrb[0].mxu0
        %409 = vdwg.mxu0
        %v411 = vsel %vm330, %v311, 0
        %v414 = vsel %vm330, %v316, 0
        %v417 = vsel %vm330, %v317, 0
        %419 = vmatprep.subr.mxu0 0.0
        %420 = vmatpush1.xpose.msra.mxu0 %v414
        %421 = vmatprep.subr.mxu0 0.0
        %422 = vmatpush1.xpose.msra.mxu0 %v417
        %423 = vmatprep.subr.mxu0 0.0
        %424 = vmatpush1.xpose.msra.mxu0 0.0
        %425 = vmatprep.subr.mxu0 0.0
        %426 = vmatpush1.xpose.msra.mxu0 0.0
        %427 = vmatprep.subr.mxu0 0.0
        %428 = vmatpush1.xpose.msra.mxu0 0.0
        %429 = vmatprep.subr.mxu0 0.0
        %430 = vmatpush1.xpose.msra.mxu0 0.0
        %431 = vmatprep.subr.mxu0 0.0
        %432 = vmatpush1.xpose.msra.mxu0 0.0
        %433 = vmatprep.subr.mxu0 0.0
        %434 = vmatpush1.xpose.msra.mxu0 0.0
        %435 = vmatprep.subr.mxu0 0.0
        %436 = vmatpush1.xpose.msra.mxu0 0.0
        %437 = vmatprep.subr.mxu0 0.0
        %438 = vmatpush1.xpose.msra.mxu0 0.0
        %439 = vmatprep.subr.mxu0 0.0
        %440 = vmatpush1.xpose.msra.mxu0 0.0
        %441 = vmatprep.subr.mxu0 0.0
        %442 = vmatpush1.xpose.msra.mxu0 0.0
        %443 = vmatprep.subr.mxu0 0.0
        %444 = vmatpush1.xpose.msra.mxu0 0.0
        %445 = vmatprep.subr.mxu0 0.0
        %446 = vmatpush1.xpose.msra.mxu0 0.0
        %447 = vmatprep.subr.mxu0 0.0
        %448 = vmatpush1.xpose.msra.mxu0 0.0
        %449 = vmatprep.subr.mxu0 0.0
        %450 = vmatpush1.xpose.msra.mxu0 0.0
        %451 = vmatprep.subr.mxu0 0.0
        %452 = vmatpush1.xpose.msra.mxu0 0.0
        %453 = vmatprep.subr.mxu0 0.0
        %454 = vmatpush1.xpose.msra.mxu0 0.0
        %455 = vmatprep.subr.mxu0 0.0
        %456 = vmatpush1.xpose.msra.mxu0 0.0
        %457 = vmatprep.subr.mxu0 0.0
        %458 = vmatpush1.xpose.msra.mxu0 0.0
        %459 = vmatprep.subr.mxu0 0.0
        %460 = vmatpush1.xpose.msra.mxu0 0.0
        %461 = vmatprep.subr.mxu0 0.0
        %462 = vmatpush1.xpose.msra.mxu0 0.0
        %463 = vmatprep.subr.mxu0 0.0
        %464 = vmatpush1.xpose.msra.mxu0 0.0
        %465 = vmatprep.subr.mxu0 0.0
        %466 = vmatpush1.xpose.msra.mxu0 0.0
        %467 = vmatprep.subr.mxu0 0.0
        %468 = vmatpush1.xpose.msra.mxu0 0.0
        %469 = vmatprep.subr.mxu0 0.0
        %470 = vmatpush1.xpose.msra.mxu0 0.0
        %471 = vmatprep.subr.mxu0 0.0
        %472 = vmatpush1.xpose.msra.mxu0 0.0
        %473 = vmatprep.subr.mxu0 0.0
        %474 = vmatpush1.xpose.msra.mxu0 0.0
        %475 = vmatprep.subr.mxu0 0.0
        %476 = vmatpush1.xpose.msra.mxu0 0.0
        %477 = vmatprep.subr.mxu0 0.0
        %478 = vmatpush1.xpose.msra.mxu0 0.0
        %479 = vmatprep.subr.mxu0 0.0
        %480 = vmatpush1.xpose.msra.mxu0 0.0
        %481 = vmatprep.subr.mxu0 0.0
        %482 = vmatpush1.xpose.msra.mxu0 0.0
        %483 = vmatprep.mubr.f32.mxu0 0.0
        %484 = vmatmul.mubr.f32.gmra.mrb[0].mxu0 %v411
        %v485 = vpop.f32.mrb[0].mxu0
        %v486 = vadd.f32 0.0, %v485
        %v487 = vpop.f32.mrb[0].mxu0
        %488 = vdwg.mxu0
        %v490 = vsel %vm330, %v312, 0
        %v493 = vsel %vm330, %v318, 0
        %v496 = vsel %vm330, %v319, 0
        %498 = vmatprep.subr.mxu0 0.0
        %499 = vmatpush1.xpose.msra.mxu0 %v493
        %500 = vmatprep.subr.mxu0 0.0
        %501 = vmatpush1.xpose.msra.mxu0 %v496
        %502 = vmatprep.subr.mxu0 0.0
        %503 = vmatpush1.xpose.msra.mxu0 0.0
        %504 = vmatprep.subr.mxu0 0.0
        %505 = vmatpush1.xpose.msra.mxu0 0.0
        %506 = vmatprep.subr.mxu0 0.0
        %507 = vmatpush1.xpose.msra.mxu0 0.0
        %508 = vmatprep.subr.mxu0 0.0
        %509 = vmatpush1.xpose.msra.mxu0 0.0
        %510 = vmatprep.subr.mxu0 0.0
        %511 = vmatpush1.xpose.msra.mxu0 0.0
        %512 = vmatprep.subr.mxu0 0.0
        %513 = vmatpush1.xpose.msra.mxu0 0.0
        %514 = vmatprep.subr.mxu0 0.0
        %515 = vmatpush1.xpose.msra.mxu0 0.0
        %516 = vmatprep.subr.mxu0 0.0
        %517 = vmatpush1.xpose.msra.mxu0 0.0
        %518 = vmatprep.subr.mxu0 0.0
        %519 = vmatpush1.xpose.msra.mxu0 0.0
        %520 = vmatprep.subr.mxu0 0.0
        %521 = vmatpush1.xpose.msra.mxu0 0.0
        %522 = vmatprep.subr.mxu0 0.0
        %523 = vmatpush1.xpose.msra.mxu0 0.0
        %524 = vmatprep.subr.mxu0 0.0
        %525 = vmatpush1.xpose.msra.mxu0 0.0
        %526 = vmatprep.subr.mxu0 0.0
        %527 = vmatpush1.xpose.msra.mxu0 0.0
        %528 = vmatprep.subr.mxu0 0.0
        %529 = vmatpush1.xpose.msra.mxu0 0.0
        %530 = vmatprep.subr.mxu0 0.0
        %531 = vmatpush1.xpose.msra.mxu0 0.0
        %532 = vmatprep.subr.mxu0 0.0
        %533 = vmatpush1.xpose.msra.mxu0 0.0
        %534 = vmatprep.subr.mxu0 0.0
        %535 = vmatpush1.xpose.msra.mxu0 0.0
        %536 = vmatprep.subr.mxu0 0.0
        %537 = vmatpush1.xpose.msra.mxu0 0.0
        %538 = vmatprep.subr.mxu0 0.0
        %539 = vmatpush1.xpose.msra.mxu0 0.0
        %540 = vmatprep.subr.mxu0 0.0
        %541 = vmatpush1.xpose.msra.mxu0 0.0
        %542 = vmatprep.subr.mxu0 0.0
        %543 = vmatpush1.xpose.msra.mxu0 0.0
        %544 = vmatprep.subr.mxu0 0.0
        %545 = vmatpush1.xpose.msra.mxu0 0.0
        %546 = vmatprep.subr.mxu0 0.0
        %547 = vmatpush1.xpose.msra.mxu0 0.0
        %548 = vmatprep.subr.mxu0 0.0
        %549 = vmatpush1.xpose.msra.mxu0 0.0
        %550 = vmatprep.subr.mxu0 0.0
        %551 = vmatpush1.xpose.msra.mxu0 0.0
        %552 = vmatprep.subr.mxu0 0.0
        %553 = vmatpush1.xpose.msra.mxu0 0.0
        %554 = vmatprep.subr.mxu0 0.0
        %555 = vmatpush1.xpose.msra.mxu0 0.0
        %556 = vmatprep.subr.mxu0 0.0
        %557 = vmatpush1.xpose.msra.mxu0 0.0
        %558 = vmatprep.subr.mxu0 0.0
        %559 = vmatpush1.xpose.msra.mxu0 0.0
        %560 = vmatprep.subr.mxu0 0.0
        %561 = vmatpush1.xpose.msra.mxu0 0.0
        %562 = vmatprep.mubr.f32.mxu0 0.0
        %563 = vmatmul.mubr.f32.gmra.mrb[0].mxu0 %v490
        %v564 = vpop.f32.mrb[0].mxu0
        %v565 = vadd.f32 0.0, %v564
        %v566 = vpop.f32.mrb[0].mxu0
        %567 = vdwg.mxu0
        %v569 = vsel %vm330, %v313, 0
        %v572 = vsel %vm330, %v320, 0
        %v575 = vsel %vm330, %v321, 0
        %577 = vmatprep.subr.mxu0 0.0
        %578 = vmatpush1.xpose.msra.mxu0 %v572
        %579 = vmatprep.subr.mxu0 0.0
        %580 = vmatpush1.xpose.msra.mxu0 %v575
        %581 = vmatprep.subr.mxu0 0.0
        %582 = vmatpush1.xpose.msra.mxu0 0.0
        %583 = vmatprep.subr.mxu0 0.0
        %584 = vmatpush1.xpose.msra.mxu0 0.0
        %585 = vmatprep.subr.mxu0 0.0
        %586 = vmatpush1.xpose.msra.mxu0 0.0
        %587 = vmatprep.subr.mxu0 0.0
        %588 = vmatpush1.xpose.msra.mxu0 0.0
        %589 = vmatprep.subr.mxu0 0.0
        %590 = vmatpush1.xpose.msra.mxu0 0.0
        %591 = vmatprep.subr.mxu0 0.0
        %592 = vmatpush1.xpose.msra.mxu0 0.0
        %593 = vmatprep.subr.mxu0 0.0
        %594 = vmatpush1.xpose.msra.mxu0 0.0
        %595 = vmatprep.subr.mxu0 0.0
        %596 = vmatpush1.xpose.msra.mxu0 0.0
        %597 = vmatprep.subr.mxu0 0.0
        %598 = vmatpush1.xpose.msra.mxu0 0.0
        %599 = vmatprep.subr.mxu0 0.0
        %600 = vmatpush1.xpose.msra.mxu0 0.0
        %601 = vmatprep.subr.mxu0 0.0
        %602 = vmatpush1.xpose.msra.mxu0 0.0
        %603 = vmatprep.subr.mxu0 0.0
        %604 = vmatpush1.xpose.msra.mxu0 0.0
        %605 = vmatprep.subr.mxu0 0.0
        %606 = vmatpush1.xpose.msra.mxu0 0.0
        %607 = vmatprep.subr.mxu0 0.0
        %608 = vmatpush1.xpose.msra.mxu0 0.0
        %609 = vmatprep.subr.mxu0 0.0
        %610 = vmatpush1.xpose.msra.mxu0 0.0
        %611 = vmatprep.subr.mxu0 0.0
        %612 = vmatpush1.xpose.msra.mxu0 0.0
        %613 = vmatprep.subr.mxu0 0.0
        %614 = vmatpush1.xpose.msra.mxu0 0.0
        %615 = vmatprep.subr.mxu0 0.0
        %616 = vmatpush1.xpose.msra.mxu0 0.0
        %617 = vmatprep.subr.mxu0 0.0
        %618 = vmatpush1.xpose.msra.mxu0 0.0
        %619 = vmatprep.subr.mxu0 0.0
        %620 = vmatpush1.xpose.msra.mxu0 0.0
        %621 = vmatprep.subr.mxu0 0.0
        %622 = vmatpush1.xpose.msra.mxu0 0.0
        %623 = vmatprep.subr.mxu0 0.0
        %624 = vmatpush1.xpose.msra.mxu0 0.0
        %625 = vmatprep.subr.mxu0 0.0
        %626 = vmatpush1.xpose.msra.mxu0 0.0
        %627 = vmatprep.subr.mxu0 0.0
        %628 = vmatpush1.xpose.msra.mxu0 0.0
        %629 = vmatprep.subr.mxu0 0.0
        %630 = vmatpush1.xpose.msra.mxu0 0.0
        %631 = vmatprep.subr.mxu0 0.0
        %632 = vmatpush1.xpose.msra.mxu0 0.0
        %633 = vmatprep.subr.mxu0 0.0
        %634 = vmatpush1.xpose.msra.mxu0 0.0
        %635 = vmatprep.subr.mxu0 0.0
        %636 = vmatpush1.xpose.msra.mxu0 0.0
        %637 = vmatprep.subr.mxu0 0.0
        %638 = vmatpush1.xpose.msra.mxu0 0.0
        %639 = vmatprep.subr.mxu0 0.0
        %640 = vmatpush1.xpose.msra.mxu0 0.0
        %641 = vmatprep.mubr.f32.mxu0 0.0
        %642 = vmatmul.mubr.f32.gmra.mrb[0].mxu0 %v569
        %v643 = vpop.f32.mrb[0].mxu0
        %v644 = vadd.f32 0.0, %v643
        %v645 = vpop.f32.mrb[0].mxu0
        %646 = vdwg.mxu0
        %vm647 = vcmask 80896
        %v648 = vsel %vm647, %v407, -inf
        %649 = vmax.xlane.f32.xlu0 %v648
        %v650 = vpop.xlane.xlu0 %649
        %v651 = vsel %vm647, %v486, -inf
        %652 = vmax.xlane.f32.xlu0 %v651
        %v653 = vpop.xlane.xlu0 %652
        %v654 = vsel %vm647, %v565, -inf
        %655 = vmax.xlane.f32.xlu0 %v654
        %v656 = vpop.xlane.xlu0 %655
        %v657 = vsel %vm647, %v644, -inf
        %658 = vmax.xlane.f32.xlu0 %v657
        %v659 = vpop.xlane.xlu0 %658
        %v660 = vsub.f32 %v407, %v650
        %v661 = vsub.f32 %v486, %v653
        %v662 = vsub.f32 %v565, %v656
        %v663 = vsub.f32 %v644, %v659
        %v664 = vmul.f32 %v660, 1.442695
        %v665 = vpow.pop %v664
        %v666 = vmul.f32 %v661, 1.442695
        %v667 = vpow.pop %v666
        %v668 = vmul.f32 %v662, 1.442695
        %v669 = vpow.pop %v668
        %v670 = vmul.f32 %v663, 1.442695
        %v671 = vpow.pop %v670
        %v672 = vsel %vm647, %v665, 0.0
        %673 = vadd.xlane.f32.xlu0 %v672
        %v674 = vpop.xlane.xlu0 %673
        %v675 = vsel %vm647, %v667, 0.0
        %676 = vadd.xlane.f32.xlu0 %v675
        %v677 = vpop.xlane.xlu0 %676
        %v678 = vsel %vm647, %v669, 0.0
        %679 = vadd.xlane.f32.xlu0 %v678
        %v680 = vpop.xlane.xlu0 %679
        %v681 = vsel %vm647, %v671, 0.0
        %682 = vadd.xlane.f32.xlu0 %v681
        %v683 = vpop.xlane.xlu0 %682
        %v684 = vrcp.pop %v674
        %v685 = vrcp.pop %v677
        %v686 = vrcp.pop %v680
        %v687 = vrcp.pop %v683
        %v688 = vmul.f32 %v665, %v684
        %v689 = vmul.f32 %v667, %v685
        %v690 = vmul.f32 %v669, %v686
        %v691 = vmul.f32 %v671, %v687
        %v693 = vsel %vm647, %v688, 0
        %vm695 = vcmask 1041408
        %v697 = vsel %vm695, %v323, 0
        %699 = vmatprep.subr.mxu0 0.0
        %700 = vmatpush1.msra.mxu0 %v322
        %701 = vmatprep.subr.mxu0 0.0
        %702 = vmatpush1.msra.mxu0 %v697
        %703 = vmatprep.subr.mxu0 0.0
        %704 = vmatpush1.msra.mxu0 0.0
        %705 = vmatprep.subr.mxu0 0.0
        %706 = vmatpush1.msra.mxu0 0.0
        %707 = vmatprep.subr.mxu0 0.0
        %708 = vmatpush1.msra.mxu0 0.0
        %709 = vmatprep.subr.mxu0 0.0
        %710 = vmatpush1.msra.mxu0 0.0
        %711 = vmatprep.subr.mxu0 0.0
        %712 = vmatpush1.msra.mxu0 0.0
        %713 = vmatprep.subr.mxu0 0.0
        %714 = vmatpush1.msra.mxu0 0.0
        %715 = vmatprep.subr.mxu0 0.0
        %716 = vmatpush1.msra.mxu0 0.0
        %717 = vmatprep.subr.mxu0 0.0
        %718 = vmatpush1.msra.mxu0 0.0
        %719 = vmatprep.subr.mxu0 0.0
        %720 = vmatpush1.msra.mxu0 0.0
        %721 = vmatprep.subr.mxu0 0.0
        %722 = vmatpush1.msra.mxu0 0.0
        %723 = vmatprep.subr.mxu0 0.0
        %724 = vmatpush1.msra.mxu0 0.0
        %725 = vmatprep.subr.mxu0 0.0
        %726 = vmatpush1.msra.mxu0 0.0
        %727 = vmatprep.subr.mxu0 0.0
        %728 = vmatpush1.msra.mxu0 0.0
        %729 = vmatprep.subr.mxu0 0.0
        %730 = vmatpush1.msra.mxu0 0.0
        %731 = vmatprep.subr.mxu0 0.0
        %732 = vmatpush1.msra.mxu0 0.0
        %733 = vmatprep.subr.mxu0 0.0
        %734 = vmatpush1.msra.mxu0 0.0
        %735 = vmatprep.subr.mxu0 0.0
        %736 = vmatpush1.msra.mxu0 0.0
        %737 = vmatprep.subr.mxu0 0.0
        %738 = vmatpush1.msra.mxu0 0.0
        %739 = vmatprep.subr.mxu0 0.0
        %740 = vmatpush1.msra.mxu0 0.0
        %741 = vmatprep.subr.mxu0 0.0
        %742 = vmatpush1.msra.mxu0 0.0
        %743 = vmatprep.subr.mxu0 0.0
        %744 = vmatpush1.msra.mxu0 0.0
        %745 = vmatprep.subr.mxu0 0.0
        %746 = vmatpush1.msra.mxu0 0.0
        %747 = vmatprep.subr.mxu0 0.0
        %748 = vmatpush1.msra.mxu0 0.0
        %749 = vmatprep.subr.mxu0 0.0
        %750 = vmatpush1.msra.mxu0 0.0
        %751 = vmatprep.subr.mxu0 0.0
        %752 = vmatpush1.msra.mxu0 0.0
        %753 = vmatprep.subr.mxu0 0.0
        %754 = vmatpush1.msra.mxu0 0.0
        %755 = vmatprep.subr.mxu0 0.0
        %756 = vmatpush1.msra.mxu0 0.0
        %757 = vmatprep.subr.mxu0 0.0
        %758 = vmatpush1.msra.mxu0 0.0
        %759 = vmatprep.subr.mxu0 0.0
        %760 = vmatpush1.msra.mxu0 0.0
        %761 = vmatprep.subr.mxu0 0.0
        %762 = vmatpush1.msra.mxu0 0.0
        %763 = vmatprep.mubr.f32.mxu0 0.0
        %764 = vmatmul.mubr.f32.gmra.mrb[0].mxu0 %v693
        %v765 = vpop.f32.mrb[0].mxu0
        %v766 = vadd.f32 0.0, %v765
        %v767 = vpop.f32.mrb[0].mxu0
        %768 = vdwg.mxu0
        %v770 = vsel %vm647, %v689, 0
        %v773 = vsel %vm695, %v325, 0
        %775 = vmatprep.subr.mxu0 0.0
        %776 = vmatpush1.msra.mxu0 %v324
        %777 = vmatprep.subr.mxu0 0.0
        %778 = vmatpush1.msra.mxu0 %v773
        %779 = vmatprep.subr.mxu0 0.0
        %780 = vmatpush1.msra.mxu0 0.0
        %781 = vmatprep.subr.mxu0 0.0
        %782 = vmatpush1.msra.mxu0 0.0
        %783 = vmatprep.subr.mxu0 0.0
        %784 = vmatpush1.msra.mxu0 0.0
        %785 = vmatprep.subr.mxu0 0.0
        %786 = vmatpush1.msra.mxu0 0.0
        %787 = vmatprep.subr.mxu0 0.0
        %788 = vmatpush1.msra.mxu0 0.0
        %789 = vmatprep.subr.mxu0 0.0
        %790 = vmatpush1.msra.mxu0 0.0
        %791 = vmatprep.subr.mxu0 0.0
        %792 = vmatpush1.msra.mxu0 0.0
        %793 = vmatprep.subr.mxu0 0.0
        %794 = vmatpush1.msra.mxu0 0.0
        %795 = vmatprep.subr.mxu0 0.0
        %796 = vmatpush1.msra.mxu0 0.0
        %797 = vmatprep.subr.mxu0 0.0
        %798 = vmatpush1.msra.mxu0 0.0
        %799 = vmatprep.subr.mxu0 0.0
        %800 = vmatpush1.msra.mxu0 0.0
        %801 = vmatprep.subr.mxu0 0.0
        %802 = vmatpush1.msra.mxu0 0.0
        %803 = vmatprep.subr.mxu0 0.0
        %804 = vmatpush1.msra.mxu0 0.0
        %805 = vmatprep.subr.mxu0 0.0
        %806 = vmatpush1.msra.mxu0 0.0
        %807 = vmatprep.subr.mxu0 0.0
        %808 = vmatpush1.msra.mxu0 0.0
        %809 = vmatprep.subr.mxu0 0.0
        %810 = vmatpush1.msra.mxu0 0.0
        %811 = vmatprep.subr.mxu0 0.0
        %812 = vmatpush1.msra.mxu0 0.0
        %813 = vmatprep.subr.mxu0 0.0
        %814 = vmatpush1.msra.mxu0 0.0
        %815 = vmatprep.subr.mxu0 0.0
        %816 = vmatpush1.msra.mxu0 0.0
        %817 = vmatprep.subr.mxu0 0.0
        %818 = vmatpush1.msra.mxu0 0.0
        %819 = vmatprep.subr.mxu0 0.0
        %820 = vmatpush1.msra.mxu0 0.0
        %821 = vmatprep.subr.mxu0 0.0
        %822 = vmatpush1.msra.mxu0 0.0
        %823 = vmatprep.subr.mxu0 0.0
        %824 = vmatpush1.msra.mxu0 0.0
        %825 = vmatprep.subr.mxu0 0.0
        %826 = vmatpush1.msra.mxu0 0.0
        %827 = vmatprep.subr.mxu0 0.0
        %828 = vmatpush1.msra.mxu0 0.0
        %829 = vmatprep.subr.mxu0 0.0
        %830 = vmatpush1.msra.mxu0 0.0
        %831 = vmatprep.subr.mxu0 0.0
        %832 = vmatpush1.msra.mxu0 0.0
        %833 = vmatprep.subr.mxu0 0.0
        %834 = vmatpush1.msra.mxu0 0.0
        %835 = vmatprep.subr.mxu0 0.0
        %836 = vmatpush1.msra.mxu0 0.0
        %837 = vmatprep.subr.mxu0 0.0
        %838 = vmatpush1.msra.mxu0 0.0
        %839 = vmatprep.mubr.f32.mxu0 0.0
        %840 = vmatmul.mubr.f32.gmra.mrb[0].mxu0 %v770
        %v841 = vpop.f32.mrb[0].mxu0
        %v842 = vadd.f32 0.0, %v841
        %v843 = vpop.f32.mrb[0].mxu0
        %844 = vdwg.mxu0
        %v846 = vsel %vm647, %v690, 0
        %v849 = vsel %vm695, %v327, 0
        %851 = vmatprep.subr.mxu0 0.0
        %852 = vmatpush1.msra.mxu0 %v326
        %853 = vmatprep.subr.mxu0 0.0
        %854 = vmatpush1.msra.mxu0 %v849
        %855 = vmatprep.subr.mxu0 0.0
        %856 = vmatpush1.msra.mxu0 0.0
        %857 = vmatprep.subr.mxu0 0.0
        %858 = vmatpush1.msra.mxu0 0.0
        %859 = vmatprep.subr.mxu0 0.0
        %860 = vmatpush1.msra.mxu0 0.0
        %861 = vmatprep.subr.mxu0 0.0
        %862 = vmatpush1.msra.mxu0 0.0
        %863 = vmatprep.subr.mxu0 0.0
        %864 = vmatpush1.msra.mxu0 0.0
        %865 = vmatprep.subr.mxu0 0.0
        %866 = vmatpush1.msra.mxu0 0.0
        %867 = vmatprep.subr.mxu0 0.0
        %868 = vmatpush1.msra.mxu0 0.0
        %869 = vmatprep.subr.mxu0 0.0
        %870 = vmatpush1.msra.mxu0 0.0
        %871 = vmatprep.subr.mxu0 0.0
        %872 = vmatpush1.msra.mxu0 0.0
        %873 = vmatprep.subr.mxu0 0.0
        %874 = vmatpush1.msra.mxu0 0.0
        %875 = vmatprep.subr.mxu0 0.0
        %876 = vmatpush1.msra.mxu0 0.0
        %877 = vmatprep.subr.mxu0 0.0
        %878 = vmatpush1.msra.mxu0 0.0
        %879 = vmatprep.subr.mxu0 0.0
        %880 = vmatpush1.msra.mxu0 0.0
        %881 = vmatprep.subr.mxu0 0.0
        %882 = vmatpush1.msra.mxu0 0.0
        %883 = vmatprep.subr.mxu0 0.0
        %884 = vmatpush1.msra.mxu0 0.0
        %885 = vmatprep.subr.mxu0 0.0
        %886 = vmatpush1.msra.mxu0 0.0
        %887 = vmatprep.subr.mxu0 0.0
        %888 = vmatpush1.msra.mxu0 0.0
        %889 = vmatprep.subr.mxu0 0.0
        %890 = vmatpush1.msra.mxu0 0.0
        %891 = vmatprep.subr.mxu0 0.0
        %892 = vmatpush1.msra.mxu0 0.0
        %893 = vmatprep.subr.mxu0 0.0
        %894 = vmatpush1.msra.mxu0 0.0
        %895 = vmatprep.subr.mxu0 0.0
        %896 = vmatpush1.msra.mxu0 0.0
        %897 = vmatprep.subr.mxu0 0.0
        %898 = vmatpush1.msra.mxu0 0.0
        %899 = vmatprep.subr.mxu0 0.0
        %900 = vmatpush1.msra.mxu0 0.0
        %901 = vmatprep.subr.mxu0 0.0
        %902 = vmatpush1.msra.mxu0 0.0
        %903 = vmatprep.subr.mxu0 0.0
        %904 = vmatpush1.msra.mxu0 0.0
        %905 = vmatprep.subr.mxu0 0.0
        %906 = vmatpush1.msra.mxu0 0.0
        %907 = vmatprep.subr.mxu0 0.0
        %908 = vmatpush1.msra.mxu0 0.0
        %909 = vmatprep.subr.mxu0 0.0
        %910 = vmatpush1.msra.mxu0 0.0
        %911 = vmatprep.subr.mxu0 0.0
        %912 = vmatpush1.msra.mxu0 0.0
        %913 = vmatprep.subr.mxu0 0.0
        %914 = vmatpush1.msra.mxu0 0.0
        %915 = vmatprep.mubr.f32.mxu0 0.0
        %916 = vmatmul.mubr.f32.gmra.mrb[0].mxu0 %v846
        %v917 = vpop.f32.mrb[0].mxu0
        %v918 = vadd.f32 0.0, %v917
        %v919 = vpop.f32.mrb[0].mxu0
        %920 = vdwg.mxu0
        %v922 = vsel %vm647, %v691, 0
        %v925 = vsel %vm695, %v329, 0
        %927 = vmatprep.subr.mxu0 0.0
        %928 = vmatpush1.msra.mxu0 %v328
        %929 = vmatprep.subr.mxu0 0.0
        %930 = vmatpush1.msra.mxu0 %v925
        %931 = vmatprep.subr.mxu0 0.0
        %932 = vmatpush1.msra.mxu0 0.0
        %933 = vmatprep.subr.mxu0 0.0
        %934 = vmatpush1.msra.mxu0 0.0
        %935 = vmatprep.subr.mxu0 0.0
        %936 = vmatpush1.msra.mxu0 0.0
        %937 = vmatprep.subr.mxu0 0.0
        %938 = vmatpush1.msra.mxu0 0.0
        %939 = vmatprep.subr.mxu0 0.0
        %940 = vmatpush1.msra.mxu0 0.0
        %941 = vmatprep.subr.mxu0 0.0
        %942 = vmatpush1.msra.mxu0 0.0
        %943 = vmatprep.subr.mxu0 0.0
        %944 = vmatpush1.msra.mxu0 0.0
        %945 = vmatprep.subr.mxu0 0.0
        %946 = vmatpush1.msra.mxu0 0.0
        %947 = vmatprep.subr.mxu0 0.0
        %948 = vmatpush1.msra.mxu0 0.0
        %949 = vmatprep.subr.mxu0 0.0
        %950 = vmatpush1.msra.mxu0 0.0
        %951 = vmatprep.subr.mxu0 0.0
        %952 = vmatpush1.msra.mxu0 0.0
        %953 = vmatprep.subr.mxu0 0.0
        %954 = vmatpush1.msra.mxu0 0.0
        %955 = vmatprep.subr.mxu0 0.0
        %956 = vmatpush1.msra.mxu0 0.0
        %957 = vmatprep.subr.mxu0 0.0
        %958 = vmatpush1.msra.mxu0 0.0
        %959 = vmatprep.subr.mxu0 0.0
        %960 = vmatpush1.msra.mxu0 0.0
        %961 = vmatprep.subr.mxu0 0.0
        %962 = vmatpush1.msra.mxu0 0.0
        %963 = vmatprep.subr.mxu0 0.0
        %964 = vmatpush1.msra.mxu0 0.0
        %965 = vmatprep.subr.mxu0 0.0
        %966 = vmatpush1.msra.mxu0 0.0
        %967 = vmatprep.subr.mxu0 0.0
        %968 = vmatpush1.msra.mxu0 0.0
        %969 = vmatprep.subr.mxu0 0.0
        %970 = vmatpush1.msra.mxu0 0.0
        %971 = vmatprep.subr.mxu0 0.0
        %972 = vmatpush1.msra.mxu0 0.0
        %973 = vmatprep.subr.mxu0 0.0
        %974 = vmatpush1.msra.mxu0 0.0
        %975 = vmatprep.subr.mxu0 0.0
        %976 = vmatpush1.msra.mxu0 0.0
        %977 = vmatprep.subr.mxu0 0.0
        %978 = vmatpush1.msra.mxu0 0.0
        %979 = vmatprep.subr.mxu0 0.0
        %980 = vmatpush1.msra.mxu0 0.0
        %981 = vmatprep.subr.mxu0 0.0
        %982 = vmatpush1.msra.mxu0 0.0
        %983 = vmatprep.subr.mxu0 0.0
        %984 = vmatpush1.msra.mxu0 0.0
        %985 = vmatprep.subr.mxu0 0.0
        %986 = vmatpush1.msra.mxu0 0.0
        %987 = vmatprep.subr.mxu0 0.0
        %988 = vmatpush1.msra.mxu0 0.0
        %989 = vmatprep.subr.mxu0 0.0
        %990 = vmatpush1.msra.mxu0 0.0
        %991 = vmatprep.mubr.f32.mxu0 0.0
        %992 = vmatmul.mubr.f32.gmra.mrb[0].mxu0 %v922
        %v993 = vpop.f32.mrb[0].mxu0
        %v994 = vadd.f32 0.0, %v993
        %v995 = vpop.f32.mrb[0].mxu0
        %996 = vdwg.mxu0
        %v998 = vsel %vm330, %v766, 0
        %1000 = vmatprep.subr.mxu0 0.0
        %1001 = vmatpush1.msra.mxu0 %v301
        %1002 = vmatprep.subr.mxu0 0.0
        %1003 = vmatpush1.msra.mxu0 0.0
        %1004 = vmatprep.subr.mxu0 0.0
        %1005 = vmatpush1.msra.mxu0 0.0
        %1006 = vmatprep.subr.mxu0 0.0
        %1007 = vmatpush1.msra.mxu0 0.0
        %1008 = vmatprep.subr.mxu0 0.0
        %1009 = vmatpush1.msra.mxu0 0.0
        %1010 = vmatprep.subr.mxu0 0.0
        %1011 = vmatpush1.msra.mxu0 0.0
        %1012 = vmatprep.subr.mxu0 0.0
        %1013 = vmatpush1.msra.mxu0 0.0
        %1014 = vmatprep.subr.mxu0 0.0
        %1015 = vmatpush1.msra.mxu0 0.0
        %1016 = vmatprep.subr.mxu0 0.0
        %1017 = vmatpush1.msra.mxu0 0.0
        %1018 = vmatprep.subr.mxu0 0.0
        %1019 = vmatpush1.msra.mxu0 0.0
        %1020 = vmatprep.subr.mxu0 0.0
        %1021 = vmatpush1.msra.mxu0 0.0
        %1022 = vmatprep.subr.mxu0 0.0
        %1023 = vmatpush1.msra.mxu0 0.0
        %1024 = vmatprep.subr.mxu0 0.0
        %1025 = vmatpush1.msra.mxu0 0.0
        %1026 = vmatprep.subr.mxu0 0.0
        %1027 = vmatpush1.msra.mxu0 0.0
        %1028 = vmatprep.subr.mxu0 0.0
        %1029 = vmatpush1.msra.mxu0 0.0
        %1030 = vmatprep.subr.mxu0 0.0
        %1031 = vmatpush1.msra.mxu0 0.0
        %1032 = vmatprep.subr.mxu0 0.0
        %1033 = vmatpush1.msra.mxu0 0.0
        %1034 = vmatprep.subr.mxu0 0.0
        %1035 = vmatpush1.msra.mxu0 0.0
        %1036 = vmatprep.subr.mxu0 0.0
        %1037 = vmatpush1.msra.mxu0 0.0
        %1038 = vmatprep.subr.mxu0 0.0
        %1039 = vmatpush1.msra.mxu0 0.0
        %1040 = vmatprep.subr.mxu0 0.0
        %1041 = vmatpush1.msra.mxu0 0.0
        %1042 = vmatprep.subr.mxu0 0.0
        %1043 = vmatpush1.msra.mxu0 0.0
        %1044 = vmatprep.subr.mxu0 0.0
        %1045 = vmatpush1.msra.mxu0 0.0
        %1046 = vmatprep.subr.mxu0 0.0
        %1047 = vmatpush1.msra.mxu0 0.0
        %1048 = vmatprep.subr.mxu0 0.0
        %1049 = vmatpush1.msra.mxu0 0.0
        %1050 = vmatprep.subr.mxu0 0.0
        %1051 = vmatpush1.msra.mxu0 0.0
        %1052 = vmatprep.subr.mxu0 0.0
        %1053 = vmatpush1.msra.mxu0 0.0
        %1054 = vmatprep.subr.mxu0 0.0
        %1055 = vmatpush1.msra.mxu0 0.0
        %1056 = vmatprep.subr.mxu0 0.0
        %1057 = vmatpush1.msra.mxu0 0.0
        %1058 = vmatprep.subr.mxu0 0.0
        %1059 = vmatpush1.msra.mxu0 0.0
        %1060 = vmatprep.subr.mxu0 0.0
        %1061 = vmatpush1.msra.mxu0 0.0
        %1062 = vmatprep.subr.mxu0 0.0
        %1063 = vmatpush1.msra.mxu0 0.0
        %1064 = vmatprep.mubr.f32.mxu0 0.0
        %1065 = vmatmul.mubr.f32.gmra.mrb[0].mxu0 %v998
        %v1066 = vpop.f32.mrb[0].mxu0
        %v1067 = vadd.f32 0.0, %v1066
        %v1068 = vpop.f32.mrb[0].mxu0
        %1069 = vdwg.mxu0
        %v1071 = vsel %vm330, %v842, 0
        %1073 = vmatprep.subr.mxu0 0.0
        %1074 = vmatpush1.msra.mxu0 %v302
        %1075 = vmatprep.subr.mxu0 0.0
        %1076 = vmatpush1.msra.mxu0 0.0
        %1077 = vmatprep.subr.mxu0 0.0
        %1078 = vmatpush1.msra.mxu0 0.0
        %1079 = vmatprep.subr.mxu0 0.0
        %1080 = vmatpush1.msra.mxu0 0.0
        %1081 = vmatprep.subr.mxu0 0.0
        %1082 = vmatpush1.msra.mxu0 0.0
        %1083 = vmatprep.subr.mxu0 0.0
        %1084 = vmatpush1.msra.mxu0 0.0
        %1085 = vmatprep.subr.mxu0 0.0
        %1086 = vmatpush1.msra.mxu0 0.0
        %1087 = vmatprep.subr.mxu0 0.0
        %1088 = vmatpush1.msra.mxu0 0.0
        %1089 = vmatprep.subr.mxu0 0.0
        %1090 = vmatpush1.msra.mxu0 0.0
        %1091 = vmatprep.subr.mxu0 0.0
        %1092 = vmatpush1.msra.mxu0 0.0
        %1093 = vmatprep.subr.mxu0 0.0
        %1094 = vmatpush1.msra.mxu0 0.0
        %1095 = vmatprep.subr.mxu0 0.0
        %1096 = vmatpush1.msra.mxu0 0.0
        %1097 = vmatprep.subr.mxu0 0.0
        %1098 = vmatpush1.msra.mxu0 0.0
        %1099 = vmatprep.subr.mxu0 0.0
        %1100 = vmatpush1.msra.mxu0 0.0
        %1101 = vmatprep.subr.mxu0 0.0
        %1102 = vmatpush1.msra.mxu0 0.0
        %1103 = vmatprep.subr.mxu0 0.0
        %1104 = vmatpush1.msra.mxu0 0.0
        %1105 = vmatprep.subr.mxu0 0.0
        %1106 = vmatpush1.msra.mxu0 0.0
        %1107 = vmatprep.subr.mxu0 0.0
        %1108 = vmatpush1.msra.mxu0 0.0
        %1109 = vmatprep.subr.mxu0 0.0
        %1110 = vmatpush1.msra.mxu0 0.0
        %1111 = vmatprep.subr.mxu0 0.0
        %1112 = vmatpush1.msra.mxu0 0.0
        %1113 = vmatprep.subr.mxu0 0.0
        %1114 = vmatpush1.msra.mxu0 0.0
        %1115 = vmatprep.subr.mxu0 0.0
        %1116 = vmatpush1.msra.mxu0 0.0
        %1117 = vmatprep.subr.mxu0 0.0
        %1118 = vmatpush1.msra.mxu0 0.0
        %1119 = vmatprep.subr.mxu0 0.0
        %1120 = vmatpush1.msra.mxu0 0.0
        %1121 = vmatprep.subr.mxu0 0.0
        %1122 = vmatpush1.msra.mxu0 0.0
        %1123 = vmatprep.subr.mxu0 0.0
        %1124 = vmatpush1.msra.mxu0 0.0
        %1125 = vmatprep.subr.mxu0 0.0
        %1126 = vmatpush1.msra.mxu0 0.0
        %1127 = vmatprep.subr.mxu0 0.0
        %1128 = vmatpush1.msra.mxu0 0.0
        %1129 = vmatprep.subr.mxu0 0.0
        %1130 = vmatpush1.msra.mxu0 0.0
        %1131 = vmatprep.subr.mxu0 0.0
        %1132 = vmatpush1.msra.mxu0 0.0
        %1133 = vmatprep.subr.mxu0 0.0
        %1134 = vmatpush1.msra.mxu0 0.0
        %1135 = vmatprep.subr.mxu0 0.0
        %1136 = vmatpush1.msra.mxu0 0.0
        %1137 = vmatprep.mubr.f32.mxu0 0.0
        %1138 = vmatmul.mubr.f32.gmra.mrb[0].mxu0 %v1071
        %v1139 = vpop.f32.mrb[0].mxu0
        %v1140 = vadd.f32 0.0, %v1139
        %v1141 = vpop.f32.mrb[0].mxu0
        %1142 = vdwg.mxu0
        %v1144 = vsel %vm330, %v918, 0
        %1146 = vmatprep.subr.mxu0 0.0
        %1147 = vmatpush1.msra.mxu0 %v303
        %1148 = vmatprep.subr.mxu0 0.0
        %1149 = vmatpush1.msra.mxu0 0.0
        %1150 = vmatprep.subr.mxu0 0.0
        %1151 = vmatpush1.msra.mxu0 0.0
        %1152 = vmatprep.subr.mxu0 0.0
        %1153 = vmatpush1.msra.mxu0 0.0
        %1154 = vmatprep.subr.mxu0 0.0
        %1155 = vmatpush1.msra.mxu0 0.0
        %1156 = vmatprep.subr.mxu0 0.0
        %1157 = vmatpush1.msra.mxu0 0.0
        %1158 = vmatprep.subr.mxu0 0.0
        %1159 = vmatpush1.msra.mxu0 0.0
        %1160 = vmatprep.subr.mxu0 0.0
        %1161 = vmatpush1.msra.mxu0 0.0
        %1162 = vmatprep.subr.mxu0 0.0
        %1163 = vmatpush1.msra.mxu0 0.0
        %1164 = vmatprep.subr.mxu0 0.0
        %1165 = vmatpush1.msra.mxu0 0.0
        %1166 = vmatprep.subr.mxu0 0.0
        %1167 = vmatpush1.msra.mxu0 0.0
        %1168 = vmatprep.subr.mxu0 0.0
        %1169 = vmatpush1.msra.mxu0 0.0
        %1170 = vmatprep.subr.mxu0 0.0
        %1171 = vmatpush1.msra.mxu0 0.0
        %1172 = vmatprep.subr.mxu0 0.0
        %1173 = vmatpush1.msra.mxu0 0.0
        %1174 = vmatprep.subr.mxu0 0.0
        %1175 = vmatpush1.msra.mxu0 0.0
        %1176 = vmatprep.subr.mxu0 0.0
        %1177 = vmatpush1.msra.mxu0 0.0
        %1178 = vmatprep.subr.mxu0 0.0
        %1179 = vmatpush1.msra.mxu0 0.0
        %1180 = vmatprep.subr.mxu0 0.0
        %1181 = vmatpush1.msra.mxu0 0.0
        %1182 = vmatprep.subr.mxu0 0.0
        %1183 = vmatpush1.msra.mxu0 0.0
        %1184 = vmatprep.subr.mxu0 0.0
        %1185 = vmatpush1.msra.mxu0 0.0
        %1186 = vmatprep.subr.mxu0 0.0
        %1187 = vmatpush1.msra.mxu0 0.0
        %1188 = vmatprep.subr.mxu0 0.0
        %1189 = vmatpush1.msra.mxu0 0.0
        %1190 = vmatprep.subr.mxu0 0.0
        %1191 = vmatpush1.msra.mxu0 0.0
        %1192 = vmatprep.subr.mxu0 0.0
        %1193 = vmatpush1.msra.mxu0 0.0
        %1194 = vmatprep.subr.mxu0 0.0
        %1195 = vmatpush1.msra.mxu0 0.0
        %1196 = vmatprep.subr.mxu0 0.0
        %1197 = vmatpush1.msra.mxu0 0.0
        %1198 = vmatprep.subr.mxu0 0.0
        %1199 = vmatpush1.msra.mxu0 0.0
        %1200 = vmatprep.subr.mxu0 0.0
        %1201 = vmatpush1.msra.mxu0 0.0
        %1202 = vmatprep.subr.mxu0 0.0
        %1203 = vmatpush1.msra.mxu0 0.0
        %1204 = vmatprep.subr.mxu0 0.0
        %1205 = vmatpush1.msra.mxu0 0.0
        %1206 = vmatprep.subr.mxu0 0.0
        %1207 = vmatpush1.msra.mxu0 0.0
        %1208 = vmatprep.subr.mxu0 0.0
        %1209 = vmatpush1.msra.mxu0 0.0
        %1210 = vmatprep.mubr.f32.mxu0 0.0
        %1211 = vmatmul.mubr.f32.gmra.mrb[0].mxu0 %v1144
        %v1212 = vpop.f32.mrb[0].mxu0
        %v1213 = vadd.f32 0.0, %v1212
        %v1214 = vpop.f32.mrb[0].mxu0
        %1215 = vdwg.mxu0
        %v1217 = vsel %vm330, %v994, 0
        %1219 = vmatprep.subr.mxu0 0.0
        %1220 = vmatpush1.msra.mxu0 %v304
        %1221 = vmatprep.subr.mxu0 0.0
        %1222 = vmatpush1.msra.mxu0 0.0
        %1223 = vmatprep.subr.mxu0 0.0
        %1224 = vmatpush1.msra.mxu0 0.0
        %1225 = vmatprep.subr.mxu0 0.0
        %1226 = vmatpush1.msra.mxu0 0.0
        %1227 = vmatprep.subr.mxu0 0.0
        %1228 = vmatpush1.msra.mxu0 0.0
        %1229 = vmatprep.subr.mxu0 0.0
        %1230 = vmatpush1.msra.mxu0 0.0
        %1231 = vmatprep.subr.mxu0 0.0
        %1232 = vmatpush1.msra.mxu0 0.0
        %1233 = vmatprep.subr.mxu0 0.0
        %1234 = vmatpush1.msra.mxu0 0.0
        %1235 = vmatprep.subr.mxu0 0.0
        %1236 = vmatpush1.msra.mxu0 0.0
        %1237 = vmatprep.subr.mxu0 0.0
        %1238 = vmatpush1.msra.mxu0 0.0
        %1239 = vmatprep.subr.mxu0 0.0
        %1240 = vmatpush1.msra.mxu0 0.0
        %1241 = vmatprep.subr.mxu0 0.0
        %1242 = vmatpush1.msra.mxu0 0.0
        %1243 = vmatprep.subr.mxu0 0.0
        %1244 = vmatpush1.msra.mxu0 0.0
        %1245 = vmatprep.subr.mxu0 0.0
        %1246 = vmatpush1.msra.mxu0 0.0
        %1247 = vmatprep.subr.mxu0 0.0
        %1248 = vmatpush1.msra.mxu0 0.0
        %1249 = vmatprep.subr.mxu0 0.0
        %1250 = vmatpush1.msra.mxu0 0.0
        %1251 = vmatprep.subr.mxu0 0.0
        %1252 = vmatpush1.msra.mxu0 0.0
        %1253 = vmatprep.subr.mxu0 0.0
        %1254 = vmatpush1.msra.mxu0 0.0
        %1255 = vmatprep.subr.mxu0 0.0
        %1256 = vmatpush1.msra.mxu0 0.0
        %1257 = vmatprep.subr.mxu0 0.0
        %1258 = vmatpush1.msra.mxu0 0.0
        %1259 = vmatprep.subr.mxu0 0.0
        %1260 = vmatpush1.msra.mxu0 0.0
        %1261 = vmatprep.subr.mxu0 0.0
        %1262 = vmatpush1.msra.mxu0 0.0
        %1263 = vmatprep.subr.mxu0 0.0
        %1264 = vmatpush1.msra.mxu0 0.0
        %1265 = vmatprep.subr.mxu0 0.0
        %1266 = vmatpush1.msra.mxu0 0.0
        %1267 = vmatprep.subr.mxu0 0.0
        %1268 = vmatpush1.msra.mxu0 0.0
        %1269 = vmatprep.subr.mxu0 0.0
        %1270 = vmatpush1.msra.mxu0 0.0
        %1271 = vmatprep.subr.mxu0 0.0
        %1272 = vmatpush1.msra.mxu0 0.0
        %1273 = vmatprep.subr.mxu0 0.0
        %1274 = vmatpush1.msra.mxu0 0.0
        %1275 = vmatprep.subr.mxu0 0.0
        %1276 = vmatpush1.msra.mxu0 0.0
        %1277 = vmatprep.subr.mxu0 0.0
        %1278 = vmatpush1.msra.mxu0 0.0
        %1279 = vmatprep.subr.mxu0 0.0
        %1280 = vmatpush1.msra.mxu0 0.0
        %1281 = vmatprep.subr.mxu0 0.0
        %1282 = vmatpush1.msra.mxu0 0.0
        %1283 = vmatprep.mubr.f32.mxu0 0.0
        %1284 = vmatmul.mubr.f32.gmra.mrb[0].mxu0 %v1217
        %v1285 = vpop.f32.mrb[0].mxu0
        %v1286 = vadd.f32 0.0, %v1285
        %v1287 = vpop.f32.mrb[0].mxu0
        %1288 = vdwg.mxu0
        %vm1289 = vcmask 261120
        %v1290 = vsel %vm1289, %v1067, 0.0
        %v1291 = vsel %vm1289, %v1140, 0.0
        %v1292 = vadd.f32 %v1290, %v1291
        %v1293 = vsel %vm1289, %v1213, 0.0
        %v1294 = vadd.f32 %v1292, %v1293
        %v1295 = vsel %vm1289, %v1286, 0.0
        %v1296 = vadd.f32 %v1294, %v1295
        %v1298 = vlaneseq
        %v1299 = vshrl.u32 %v1298, 7
        %v1300 = vsub.s32 0, %v1299
        %v1301 = vrot.slane %v305, %v1300
        %v1303 = vadd.f32 %v1296, %v1301
        %1304 = vst.msk [vmem:[%s278] sm:$0xff] %vm1289, %v1303
        %v1305 = vsel %vm647, %v688, 0.0
        %v1306 = vsel %vm647, %v689, 0.0
        %v1307 = vadd.f32 %v1305, %v1306
        %v1308 = vsel %vm647, %v690, 0.0
        %v1309 = vadd.f32 %v1307, %v1308
        %v1310 = vsel %vm647, %v691, 0.0
        %v1311 = vadd.f32 %v1309, %v1310
        %v1312 = vmul.f32 %v1311, 0.25
        %1313 = vst.msk [vmem:[%s285] sm:$0xff] %vm647, %v1312
        %s1314 = sand.u32 %s152, 1
        %s1315 = scalar_lea.sflag [#allocation3], %s1314
        %s1316 = sand.u32 %s152, 1
        %s1317 = smul.addr %s1316, 8
        %s1318 = scalar_lea.vmem [#allocation2], %s1317
        %s1319 = sand.u32 %s178, 1
        %s1320 = scalar_lea.sflag [#allocation5], %s1319
        %s1321 = sand.u32 %s178, 1
        %s1322 = smul.addr %s1321, 8
        %s1323 = scalar_lea.vmem [#allocation4], %s1322
        // Predicated region
        $region41: #{tpu_custom_call.1} parent=39 // pred_check
          %p1324 = pneg %p162
        $region42: #{tpu_custom_call.1} parent=39 // pred_check_branch
          %1326 = sbr.rel (%p1324) target = $region44
        $region43: #{tpu_custom_call.1} parent=39 // pred_region
          %s1328 = ssub.s32 128, 128
          %1329 = vsyncadd %s1315, %s1328
          %s1330 = smul.addr %s24, 128
          %s1331 = scalar_lea.hbm %s5, %s1330
          %s1333 = sshll.u32 %s1318, 4
          %s1334 = int_to_ptr.vmem [resolvable:$true] %s1333
          %1336 = dma.vmem_to_hbm [thread:$0]  %s1334, 128, %s1331, %s1315
        $region44: #{tpu_custom_call.1} parent=39 // pred_fallthru
          _
        // Predicated region
        $region45: #{tpu_custom_call.1} parent=39 // pred_check
          %p1337 = pneg %p188
        $region46: #{tpu_custom_call.1} parent=39 // pred_check_branch
          %1339 = sbr.rel (%p1337) target = $region48
        $region47: #{tpu_custom_call.1} parent=39 // pred_region
          %s1341 = ssub.s32 128, 128
          %1342 = vsyncadd %s1320, %s1341
          %s1343 = smul.addr %s24, 128
          %s1344 = scalar_lea.hbm %s6, %s1343
          %s1346 = sshll.u32 %s1323, 4
          %s1347 = int_to_ptr.vmem [resolvable:$true] %s1346
          %1349 = dma.vmem_to_hbm [thread:$0]  %s1347, 128, %s1344, %s1320
        $region48: #{tpu_custom_call.1} parent=39 // pred_fallthru
          _
      $region40: #{tpu_custom_call.1} parent=5 // pred_fallthru
        _
      %p1350 = scmp.le.s32.totalorder 2, %s19
      // Predicated region
      $region49: #{tpu_custom_call.1} parent=5 // pred_check
        %p1351 = pneg %p1350
      $region50: #{tpu_custom_call.1} parent=5 // pred_check_branch
        %1353 = sbr.rel (%p1351) target = $region52
      $region51: #{tpu_custom_call.1} parent=5 // pred_region
        %s1354 = ssub.s32 %s19, 2
        // Predicated region
        $region53: #{tpu_custom_call.1} parent=51 // pred_check
          %p1355 = pneg %p168
        $region54: #{tpu_custom_call.1} parent=51 // pred_check_branch
          %1357 = sbr.rel (%p1355) target = $region56
        $region55: #{tpu_custom_call.1} parent=51 // pred_region
          %s1358 = sand.u32 %s153, 1
          %s1359 = scalar_lea.sflag [#allocation3], %s1358
          %s1360 = sand.u32 %s153, 1
          %s1361 = smul.addr %s1360, 8
          %s1362 = scalar_lea.vmem [#allocation2], %s1361
          %1363 = dma.done %s1359, 128
        $region56: #{tpu_custom_call.1} parent=51 // pred_fallthru
          _
        // Predicated region
        $region57: #{tpu_custom_call.1} parent=51 // pred_check
          %p1364 = pneg %p194
        $region58: #{tpu_custom_call.1} parent=51 // pred_check_branch
          %1366 = sbr.rel (%p1364) target = $region60
        $region59: #{tpu_custom_call.1} parent=51 // pred_region
          %s1367 = sand.u32 %s179, 1
          %s1368 = scalar_lea.sflag [#allocation5], %s1367
          %s1369 = sand.u32 %s179, 1
          %s1370 = smul.addr %s1369, 8
          %s1371 = scalar_lea.vmem [#allocation4], %s1370
          %1372 = dma.done %s1368, 128
        $region60: #{tpu_custom_call.1} parent=51 // pred_fallthru
          _
      $region52: #{tpu_custom_call.1} parent=5 // pred_fallthru
        _
    $region6: #{tpu_custom_call.1} parent=1 // loop_footer
      %s23 = sadd.s32 1, %s19
    $region7: #{tpu_custom_call.1} parent=1 // loop_footer_branch
      %18 = sbr.rel target = $region3
    $region8: #{tpu_custom_call.1} parent=1 // loop_exit
      _
    %1373 = vsyncpa [#allocation3], 1
    %s1374 = scalar_lea.sflag [#allocation3], 1
    %1375 = vsyncpa %s1374, 1
    %1376 = vsyncpa [#allocation5], 1
    %s1377 = scalar_lea.sflag [#allocation5], 1
    %1378 = vsyncpa %s1377, 1

</llo_original>
